<compile_context>
chip_gen: v5e
topology: v5e:2x2
jax: 0.10.0
libtpu: 0.0.40
codegen_flags: <defaults>
</compile_context>

<pallas_src>
import jax
import jax.numpy as jnp
from jax.experimental import pallas as pl
from jax.experimental.pallas import tpu as pltpu

# ----------------------------- hyper-parameters ------------------------------
D_IN = 32                   # d_in  (visual feature dim)
TEXT_D_IN = 48              # text_d_in
D_HIDDEN = 32               # d_hidden
D_OUT = 1                   # d_out
N_HEAD = 4                  # attn_head
D_K = D_HIDDEN // N_HEAD    # attn_kv_ch (default d_hidden // attn_head)
D_V = D_K
D_QK = N_HEAD * D_K         # total q/k/v width across heads (= 32 here)
# blocks=4, skip_layers=[2]  (hard-wired into the kernel body below)

# Row offsets inside the packed weight slab (all multiples of 8 -> free
# sublane slices of the VMEM-resident slab).
_R_W1 = 0
_R_W2 = _R_W1 + D_HIDDEN
_R_W3A = _R_W2 + D_HIDDEN
_R_W3B = _R_W3A + D_HIDDEN
_R_W4 = _R_W3B + D_HIDDEN
_R_WQV = _R_W4 + D_HIDDEN          # 2*D_QK rows: [ Wq ; Wv ]
_R_WFC = _R_WQV + 2 * D_QK
_R_BLK = _R_WFC + D_HIDDEN         # (32, 32) block-diagonal head mask
_R_WO = _R_BLK + D_QK              # 8 rows, row 0 = wo^T, rows 1..7 zero
_R_END = _R_WO + 8

# Column indices inside the packed bias slab (each column is a (32, 1) vector).
_C_BT, _C_B1, _C_B2, _C_B3, _C_B4, _C_BK, _C_LNG, _C_LNB, _C_BO = range(9)


# --------------------------------- kernel ------------------------------------
def _vl_mod_attention_kernel(zx_ref, tx_ref, mask_ref, wslab_ref, wtext_ref,
                             bslab_ref, out_ref):
    f32 = jnp.float32
    zx = zx_ref[...]          # (D_IN, N)        features on sublanes, points on lanes
    tx = tx_ref[...]          # (TEXT_D_IN, N)
    valid = mask_ref[...]     # (1, N)           1.0 = valid point, 0.0 = invalid

    def w(row, nrows=D_HIDDEN):      # static sublane slice of the weight slab
        return wslab_ref[pl.ds(row, nrows), :]

    def bcol(col):                   # (D_HIDDEN, 1) bias column (lane-broadcast on use)
        return bslab_ref[:, col:col + 1]

    def mm(a, b):
        return jnp.dot(a, b, preferred_element_type=f32)

    def recip(x):                    # EUP approx reciprocal + one Newton step
        r = pl.reciprocal(x, approx=True)
        return r * (2.0 - x * r)

    # ---- text projection (wk folded in at pack time): [ text_bias ; k ] -----
    tk = mm(wtext_ref[...], tx)                        # (2*D_HIDDEN, N)
    text_bias = tk[:D_HIDDEN, :] + bcol(_C_BT)         # (D_HIDDEN, N)
    k = tk[D_HIDDEN:, :] + bcol(_C_BK)                 # (D_QK, N)

    # ---- VL modulation blocks (blocks=4, skip_layers=[2]) --------------------
    x = jnp.maximum((mm(w(_R_W1), zx) + bcol(_C_B1)) * text_bias, 0.0)
    x = jnp.maximum((mm(w(_R_W2), x) + bcol(_C_B2)) * text_bias, 0.0)
    # skip connection: W3 @ cat([zx, x]) == W3a @ zx + W3b @ x   (no concat)
    x = mm(w(_R_W3A), zx) + mm(w(_R_W3B), x) + bcol(_C_B3)
    x = jnp.maximum(x * text_bias, 0.0)
    x = jnp.maximum((mm(w(_R_W4), x) + bcol(_C_B4)) * text_bias, 0.0)

    # ---- MHLinearAttention ('img_softmax_q') ---------------------------------
    residual = x
    qv = mm(w(_R_WQV, 2 * D_QK), x)                    # (2*D_QK, N): [ q ; v ]
    q = qv[:D_QK, :]
    v = qv[D_QK:, :]

    # per-head softmax of q over its D_K feature rows: tile-aligned (4, 8, N)
    # view, exact per-head max (no global-max underflow), EUP reciprocal.
    q3 = q.reshape(N_HEAD, D_K, q.shape[-1])
    q3 = q3 - jnp.max(q3, axis=1, keepdims=True)
    eq = jnp.exp(q3)
    q_sm = (eq * recip(jnp.sum(eq, axis=1, keepdims=True))).reshape(D_QK, -1)

    # masked softmax of k over the sequence (lane) axis
    k = jnp.where(valid > 0.0, k, -1e9)
    ek = jnp.exp(k - jnp.max(k, axis=1, keepdims=True))
    k_sm = ek * recip(jnp.sum(ek, axis=1, keepdims=True))         # (D_QK, N)

    # linear attention: ctx^T = V K^T (kept per-head via the block-diag mask),
    # attn^T = ctx^T @ softmax(Q) -- two full-width MXU ops, no per-head loop.
    ctx_t = jax.lax.dot_general(v, k_sm, (((1,), (1,)), ((), ())),
                                preferred_element_type=f32)        # (D_QK, D_QK)
    ctx_t = ctx_t * w(_R_BLK, D_QK)                                # same-head blocks only
    attn = mm(ctx_t, q_sm)                                         # (D_QK, N)
    x = mm(w(_R_WFC), attn) + residual                             # (D_HIDDEN, N)

    # LayerNorm over the feature (sublane) axis
    mu = jnp.mean(x, axis=0, keepdims=True)                        # (1, N)
    xc = x - mu
    var = jnp.mean(xc * xc, axis=0, keepdims=True)
    x = xc * jax.lax.rsqrt(var + 1e-5) * bcol(_C_LNG) + bcol(_C_LNB)

    # output head: lane-dense (D_OUT, N) row (wo^T lives in rows _R_WO.. of slab)
    y = mm(w(_R_WO, 8), x)                                         # (8, N), row 0 valid
    bo = bslab_ref[0:1, _C_BO:_C_BO + 1]                           # (1, 1)
    out_ref[...] = (y[:D_OUT, :] + bo).astype(out_ref.dtype)


# ------------------------------ param packing ---------------------------------
def pack_params(p):
    """Pack the 18 small parameter arrays into 3 kernel slabs.

    Call ONCE at parameter-load time (outside the per-call jit).  All weights
    are stored transposed, i.e. (out_features, in_features), matching the
    feature-on-sublane / points-on-lane kernel layout.
    """
    f32 = jnp.float32
    t = lambda a: jnp.asarray(a, f32).T
    col = lambda a: jnp.asarray(a, f32).reshape(D_HIDDEN, 1)

    wt_t = t(p["wt"])                                   # (D_HIDDEN, TEXT_D_IN)
    wk_t = t(p["wk"])                                   # (D_QK, D_HIDDEN)
    # fold k = wk^T @ (wt^T @ tx + bt) into the text projection
    wtext = jnp.concatenate([wt_t, wk_t @ wt_t], axis=0)   # (2*D_HIDDEN, TEXT_D_IN)

    blk = jnp.kron(jnp.eye(N_HEAD, dtype=f32), jnp.ones((D_K, D_K), f32))
    wo8 = jnp.concatenate([t(p["wo"]), jnp.zeros((7, D_HIDDEN), f32)], axis=0)

    wslab = jnp.concatenate([
        t(p["w1"]), t(p["w2"]),
        t(p["w3"][:D_IN]), t(p["w3"][D_IN:]),
        t(p["w4"]),
        t(p["wq"]), t(p["wv"]),
        t(p["wfc"]),
        blk, wo8,
    ], axis=0)
    assert wslab.shape == (_R_END, D_HIDDEN)

    bslab = jnp.concatenate([
        col(p["bt"]), col(p["b1"]), col(p["b2"]), col(p["b3"]), col(p["b4"]),
        wk_t @ col(p["bt"]),                            # k bias from the wk fold
        col(p["ln_g"]), col(p["ln_b"]),
        jnp.broadcast_to(jnp.asarray(p["bo"], f32).reshape(1, 1), (D_HIDDEN, 1)),
    ], axis=1)                                          # (D_HIDDEN, 9)
    return wslab, wtext, bslab


# -------------------------------- wrapper --------------------------------------
@jax.jit
def vl_mod_attention(zx, text_x, mask, wslab, wtext, bslab):
    B, N, _ = zx.shape
    # one-time per-call layout plumbing: features -> sublanes, points -> lanes
    zx_t = jnp.transpose(zx, (0, 2, 1))                 # (B, D_IN, N)
    tx_t = jnp.transpose(text_x, (0, 2, 1))             # (B, TEXT_D_IN, N)
    valid = mask.astype(jnp.float32).reshape(B, 1, N)   # (B, 1, N), ~1 KiB

    out = pl.pallas_call(
        _vl_mod_attention_kernel,
        out_shape=jax.ShapeDtypeStruct((B, D_OUT, N), jnp.float32),
        grid=(B,),
        in_specs=[
            pl.BlockSpec((None, D_IN, N), lambda b: (b, 0, 0)),
            pl.BlockSpec((None, TEXT_D_IN, N), lambda b: (b, 0, 0)),
            pl.BlockSpec((None, 1, N), lambda b: (b, 0, 0)),
            pl.BlockSpec(wslab.shape, lambda b: (0, 0)),   # constant block: resident
            pl.BlockSpec(wtext.shape, lambda b: (0, 0)),
            pl.BlockSpec(bslab.shape, lambda b: (0, 0)),
        ],
        out_specs=pl.BlockSpec((None, D_OUT, N), lambda b: (b, 0, 0)),
        compiler_params=pltpu.CompilerParams(
            dimension_semantics=("parallel",)),  # B>=2 keeps both v7x TCs busy
    )(zx_t, tx_t, valid, wslab, wtext, bslab)

    # back to the module's (B, N, d_out) layout (size-1 dim: free transpose)
    return jnp.transpose(out, (0, 2, 1))


# --------------------------- deterministic init --------------------------------
def init_params(key):
    def kaiming(k, fan_in, fan_out):
        return (jax.random.normal(k, (fan_in, fan_out), jnp.float32)
                * jnp.sqrt(2.0 / fan_in))

    ks = jax.random.split(key, 10)
    zeros_h = jnp.zeros((1, D_HIDDEN), jnp.float32)
    return {
        "wt": kaiming(ks[0], TEXT_D_IN, D_HIDDEN), "bt": zeros_h,
        "w1": kaiming(ks[1], D_IN, D_HIDDEN), "b1": zeros_h,
        "w2": kaiming(ks[2], D_HIDDEN, D_HIDDEN), "b2": zeros_h,
        "w3": kaiming(ks[3], D_IN + D_HIDDEN, D_HIDDEN), "b3": zeros_h,  # skip layer
        "w4": kaiming(ks[4], D_HIDDEN, D_HIDDEN), "b4": zeros_h,
        "wq": kaiming(ks[5], D_HIDDEN, N_HEAD * D_K),
        "wk": kaiming(ks[6], D_HIDDEN, N_HEAD * D_K),
        "wv": kaiming(ks[7], D_HIDDEN, N_HEAD * D_V),
        "wfc": kaiming(ks[8], N_HEAD * D_V, D_HIDDEN),
        "ln_g": jnp.ones((1, D_HIDDEN), jnp.float32),
        "ln_b": jnp.zeros((1, D_HIDDEN), jnp.float32),
        "wo": kaiming(ks[9], D_HIDDEN, D_OUT),
        "bo": jnp.zeros((1, D_OUT), jnp.float32),
    }


# ------------------------------ pure-JAX reference -----------------------------
def reference(zx, text_x, mask, p):
    text_bias = text_x @ p["wt"] + p["bt"]
    x = jnp.maximum((zx @ p["w1"] + p["b1"]) * text_bias, 0.0)
    x = jnp.maximum((x @ p["w2"] + p["b2"]) * text_bias, 0.0)
    x = jnp.concatenate([zx, x], axis=-1)
    x = jnp.maximum((x @ p["w3"] + p["b3"]) * text_bias, 0.0)
    x = jnp.maximum((x @ p["w4"] + p["b4"]) * text_bias, 0.0)
    residual = x
    B, N, _ = zx.shape
    q = (x @ p["wq"]).reshape(B, N, N_HEAD, D_K)
    k = (text_bias @ p["wk"]).reshape(B, N, N_HEAD, D_K)
    v = (x @ p["wv"]).reshape(B, N, N_HEAD, D_V)
    q = jax.nn.softmax(q, axis=-1)
    k = jnp.where(mask[..., None] > 0, k, -1e9)
    k = jax.nn.softmax(k, axis=1)
    ctx = jnp.einsum("bnhk,bnhv->bhkv", k, v)
    attn = jnp.einsum("bnhk,bhkv->bnhv", q, ctx).reshape(B, N, N_HEAD * D_V)
    x = attn @ p["wfc"] + residual
    mu = x.mean(-1, keepdims=True)
    var = ((x - mu) ** 2).mean(-1, keepdims=True)
    x = (x - mu) / jnp.sqrt(var + 1e-5) * p["ln_g"] + p["ln_b"]
    return x @ p["wo"] + p["bo"]


# ---------------------------------- main ---------------------------------------
if __name__ == "__main__":
    key = jax.random.PRNGKey(0)
    k_zx, k_tx, k_p = jax.random.split(key, 3)

    B, N = 2, 128
    zx = jax.random.normal(k_zx, (B, N, D_IN), jnp.float32)
    text_x = jax.random.normal(k_tx, (B, N, TEXT_D_IN), jnp.float32)
    # valid-points mask: last 16 points of every batch are invalid
    mask = jnp.concatenate(
        [jnp.ones((B, N - 16, 1), jnp.float32), jnp.zeros((B, 16, 1), jnp.float32)],
        axis=1)

    params = init_params(k_p)
    # pack once at "parameter load" time -- NOT inside the per-call jitted path
    wslab, wtext, bslab = pack_params(params)

    out = jax.block_until_ready(
        vl_mod_attention(zx, text_x, mask, wslab, wtext, bslab))

    ref = reference(zx, text_x, mask, params)
    assert out.shape == (B, N, D_OUT)
    # differences vs the reference are f32 reassociation (split-w3, wk fold,
    # fused qv) + Newton-refined approx reciprocal -> comfortably within 1e-3
    err = float(jnp.max(jnp.abs(out - ref)))
    assert jnp.allclose(out, ref, atol=1e-3, rtol=1e-3), err

    print("KERNEL_OK")
</pallas_src>

<mosaic_0001>
module attributes {stable_mosaic.version = 11 : i64} {
  func.func @_vl_mod_attention_kernel(%arg0: i32, %arg1: memref<1x32x128xf32, #tpu.memory_space<vmem>>, %arg2: memref<1x48x128xf32, #tpu.memory_space<vmem>>, %arg3: memref<1x1x128xf32, #tpu.memory_space<vmem>>, %arg4: memref<296x32xf32, #tpu.memory_space<vmem>>, %arg5: memref<64x48xf32, #tpu.memory_space<vmem>>, %arg6: memref<32x9xf32, #tpu.memory_space<vmem>>, %arg7: memref<1x1x128xf32, #tpu.memory_space<vmem>>) attributes {dimension_semantics = [#tpu.dimension_semantics<parallel>], iteration_bounds = array<i64: 2>, scalar_prefetch = 0 : i64, scratch_operands = 0 : i64, tpu.core_type = #tpu.core_type<tc>, window_params = [{transform_indices = @transform_0, window_bounds = array<i64: 1, 32, 128>}, {transform_indices = @transform_1, window_bounds = array<i64: 1, 48, 128>}, {transform_indices = @transform_2, window_bounds = array<i64: 1, 1, 128>}, {pipeline_mode = #tpu.pipeline_mode<synchronous>, transform_indices = @transform_3, window_bounds = array<i64: 296, 32>}, {pipeline_mode = #tpu.pipeline_mode<synchronous>, transform_indices = @transform_4, window_bounds = array<i64: 64, 48>}, {pipeline_mode = #tpu.pipeline_mode<synchronous>, transform_indices = @transform_5, window_bounds = array<i64: 32, 9>}, {transform_indices = @transform_6, window_bounds = array<i64: 1, 1, 128>}]} {
    %c0 = arith.constant 0 : index
    %c0_0 = arith.constant 0 : index
    %c0_1 = arith.constant 0 : index
    %0 = vector.load %arg1[%c0, %c0_0, %c0_1] : memref<1x32x128xf32, #tpu.memory_space<vmem>>, vector<1x32x128xf32>
    %1 = vector.shape_cast %0 : vector<1x32x128xf32> to vector<32x128xf32>
    %c0_2 = arith.constant 0 : index
    %c0_3 = arith.constant 0 : index
    %c0_4 = arith.constant 0 : index
    %2 = vector.load %arg2[%c0_2, %c0_3, %c0_4] : memref<1x48x128xf32, #tpu.memory_space<vmem>>, vector<1x48x128xf32>
    %3 = vector.shape_cast %2 : vector<1x48x128xf32> to vector<48x128xf32>
    %c0_5 = arith.constant 0 : index
    %c0_6 = arith.constant 0 : index
    %c0_7 = arith.constant 0 : index
    %4 = vector.load %arg3[%c0_5, %c0_6, %c0_7] : memref<1x1x128xf32, #tpu.memory_space<vmem>>, vector<1x1x128xf32>
    %5 = vector.shape_cast %4 : vector<1x1x128xf32> to vector<1x128xf32>
    %c0_8 = arith.constant 0 : index
    %c0_9 = arith.constant 0 : index
    %6 = vector.load %arg5[%c0_8, %c0_9] : memref<64x48xf32, #tpu.memory_space<vmem>>, vector<64x48xf32>
    %cst = arith.constant dense<0.000000e+00> : vector<64x128xf32>
    %7 = tpu.matmul %6, %3, %cst {dimension_numbers = #tpu.dot_dimension_numbers<[1], [0], [0], [1], [0, 0, 1, 1], [], []>} : vector<64x48xf32>, vector<48x128xf32>, vector<64x128xf32> -> vector<64x128xf32>
    %8 = vector.extract_strided_slice %7 {offsets = [0, 0], sizes = [32, 128], strides = [1, 1]} : vector<64x128xf32> to vector<32x128xf32>
    %c0_10 = arith.constant 0 : index
    %c0_11 = arith.constant 0 : index
    %9 = vector.load %arg6[%c0_10, %c0_11] : memref<32x9xf32, #tpu.memory_space<vmem>>, vector<32x1xf32>
    %10 = vector.broadcast %9 : vector<32x1xf32> to vector<32x128xf32>
    %11 = arith.addf %8, %10 : vector<32x128xf32>
    %12 = vector.extract_strided_slice %7 {offsets = [32, 0], sizes = [32, 128], strides = [1, 1]} : vector<64x128xf32> to vector<32x128xf32>
    %c0_12 = arith.constant 0 : index
    %c5 = arith.constant 5 : index
    %13 = vector.load %arg6[%c0_12, %c5] : memref<32x9xf32, #tpu.memory_space<vmem>>, vector<32x1xf32>
    %14 = vector.broadcast %13 : vector<32x1xf32> to vector<32x128xf32>
    %15 = arith.addf %12, %14 : vector<32x128xf32>
    %c0_13 = arith.constant 0 : index
    %c0_14 = arith.constant 0 : index
    %16 = vector.load %arg4[%c0_13, %c0_14] : memref<296x32xf32, #tpu.memory_space<vmem>>, vector<32x32xf32>
    %cst_15 = arith.constant dense<0.000000e+00> : vector<32x128xf32>
    %17 = tpu.matmul %16, %1, %cst_15 {dimension_numbers = #tpu.dot_dimension_numbers<[1], [0], [0], [1], [0, 0, 1, 1], [], []>} : vector<32x32xf32>, vector<32x128xf32>, vector<32x128xf32> -> vector<32x128xf32>
    %c0_16 = arith.constant 0 : index
    %c1 = arith.constant 1 : index
    %18 = vector.load %arg6[%c0_16, %c1] : memref<32x9xf32, #tpu.memory_space<vmem>>, vector<32x1xf32>
    %19 = vector.broadcast %18 : vector<32x1xf32> to vector<32x128xf32>
    %20 = arith.addf %17, %19 : vector<32x128xf32>
    %21 = arith.mulf %20, %11 : vector<32x128xf32>
    %cst_17 = arith.constant 0.000000e+00 : f32
    %22 = vector.broadcast %cst_17 : f32 to vector<32x128xf32>
    %23 = arith.maximumf %21, %22 : vector<32x128xf32>
    %c32 = arith.constant 32 : index
    %c0_18 = arith.constant 0 : index
    %24 = vector.load %arg4[%c32, %c0_18] : memref<296x32xf32, #tpu.memory_space<vmem>>, vector<32x32xf32>
    %cst_19 = arith.constant dense<0.000000e+00> : vector<32x128xf32>
    %25 = tpu.matmul %24, %23, %cst_19 {dimension_numbers = #tpu.dot_dimension_numbers<[1], [0], [0], [1], [0, 0, 1, 1], [], []>} : vector<32x32xf32>, vector<32x128xf32>, vector<32x128xf32> -> vector<32x128xf32>
    %c0_20 = arith.constant 0 : index
    %c2 = arith.constant 2 : index
    %26 = vector.load %arg6[%c0_20, %c2] : memref<32x9xf32, #tpu.memory_space<vmem>>, vector<32x1xf32>
    %27 = vector.broadcast %26 : vector<32x1xf32> to vector<32x128xf32>
    %28 = arith.addf %25, %27 : vector<32x128xf32>
    %29 = arith.mulf %28, %11 : vector<32x128xf32>
    %cst_21 = arith.constant 0.000000e+00 : f32
    %30 = vector.broadcast %cst_21 : f32 to vector<32x128xf32>
    %31 = arith.maximumf %29, %30 : vector<32x128xf32>
    %c64 = arith.constant 64 : index
    %c0_22 = arith.constant 0 : index
    %32 = vector.load %arg4[%c64, %c0_22] : memref<296x32xf32, #tpu.memory_space<vmem>>, vector<32x32xf32>
    %cst_23 = arith.constant dense<0.000000e+00> : vector<32x128xf32>
    %33 = tpu.matmul %32, %1, %cst_23 {dimension_numbers = #tpu.dot_dimension_numbers<[1], [0], [0], [1], [0, 0, 1, 1], [], []>} : vector<32x32xf32>, vector<32x128xf32>, vector<32x128xf32> -> vector<32x128xf32>
    %c96 = arith.constant 96 : index
    %c0_24 = arith.constant 0 : index
    %34 = vector.load %arg4[%c96, %c0_24] : memref<296x32xf32, #tpu.memory_space<vmem>>, vector<32x32xf32>
    %cst_25 = arith.constant dense<0.000000e+00> : vector<32x128xf32>
    %35 = tpu.matmul %34, %31, %cst_25 {dimension_numbers = #tpu.dot_dimension_numbers<[1], [0], [0], [1], [0, 0, 1, 1], [], []>} : vector<32x32xf32>, vector<32x128xf32>, vector<32x128xf32> -> vector<32x128xf32>
    %36 = arith.addf %33, %35 : vector<32x128xf32>
    %c0_26 = arith.constant 0 : index
    %c3 = arith.constant 3 : index
    %37 = vector.load %arg6[%c0_26, %c3] : memref<32x9xf32, #tpu.memory_space<vmem>>, vector<32x1xf32>
    %38 = vector.broadcast %37 : vector<32x1xf32> to vector<32x128xf32>
    %39 = arith.addf %36, %38 : vector<32x128xf32>
    %40 = arith.mulf %39, %11 : vector<32x128xf32>
    %cst_27 = arith.constant 0.000000e+00 : f32
    %41 = vector.broadcast %cst_27 : f32 to vector<32x128xf32>
    %42 = arith.maximumf %40, %41 : vector<32x128xf32>
    %c128 = arith.constant 128 : index
    %c0_28 = arith.constant 0 : index
    %43 = vector.load %arg4[%c128, %c0_28] : memref<296x32xf32, #tpu.memory_space<vmem>>, vector<32x32xf32>
    %cst_29 = arith.constant dense<0.000000e+00> : vector<32x128xf32>
    %44 = tpu.matmul %43, %42, %cst_29 {dimension_numbers = #tpu.dot_dimension_numbers<[1], [0], [0], [1], [0, 0, 1, 1], [], []>} : vector<32x32xf32>, vector<32x128xf32>, vector<32x128xf32> -> vector<32x128xf32>
    %c0_30 = arith.constant 0 : index
    %c4 = arith.constant 4 : index
    %45 = vector.load %arg6[%c0_30, %c4] : memref<32x9xf32, #tpu.memory_space<vmem>>, vector<32x1xf32>
    %46 = vector.broadcast %45 : vector<32x1xf32> to vector<32x128xf32>
    %47 = arith.addf %44, %46 : vector<32x128xf32>
    %48 = arith.mulf %47, %11 : vector<32x128xf32>
    %cst_31 = arith.constant 0.000000e+00 : f32
    %49 = vector.broadcast %cst_31 : f32 to vector<32x128xf32>
    %50 = arith.maximumf %48, %49 : vector<32x128xf32>
    %c160 = arith.constant 160 : index
    %c0_32 = arith.constant 0 : index
    %51 = vector.load %arg4[%c160, %c0_32] : memref<296x32xf32, #tpu.memory_space<vmem>>, vector<64x32xf32>
    %cst_33 = arith.constant dense<0.000000e+00> : vector<64x128xf32>
    %52 = tpu.matmul %51, %50, %cst_33 {dimension_numbers = #tpu.dot_dimension_numbers<[1], [0], [0], [1], [0, 0, 1, 1], [], []>} : vector<64x32xf32>, vector<32x128xf32>, vector<64x128xf32> -> vector<64x128xf32>
    %53 = vector.extract_strided_slice %52 {offsets = [0, 0], sizes = [32, 128], strides = [1, 1]} : vector<64x128xf32> to vector<32x128xf32>
    %54 = vector.extract_strided_slice %52 {offsets = [32, 0], sizes = [32, 128], strides = [1, 1]} : vector<64x128xf32> to vector<32x128xf32>
    %55 = vector.shape_cast %53 : vector<32x128xf32> to vector<4x8x128xf32>
    %cst_34 = arith.constant dense<0xFF800000> : vector<4x128xf32>
    %56 = vector.multi_reduction <maximumf>, %55, %cst_34 [1] : vector<4x8x128xf32> to vector<4x128xf32>
    %57 = vector.shape_cast %56 : vector<4x128xf32> to vector<4x1x128xf32>
    %58 = vector.broadcast %57 : vector<4x1x128xf32> to vector<4x8x128xf32>
    %59 = arith.subf %55, %58 : vector<4x8x128xf32>
    %60 = math.exp %59 : vector<4x8x128xf32>
    %cst_35 = arith.constant dense<0.000000e+00> : vector<4x128xf32>
    %61 = vector.multi_reduction <add>, %60, %cst_35 [1] : vector<4x8x128xf32> to vector<4x128xf32>
    %62 = vector.shape_cast %61 : vector<4x128xf32> to vector<4x1x128xf32>
    %63 = tpu.reciprocal %62 {approx = true} : vector<4x1x128xf32> -> vector<4x1x128xf32>
    %64 = arith.mulf %62, %63 : vector<4x1x128xf32>
    %cst_36 = arith.constant 2.000000e+00 : f32
    %65 = vector.broadcast %cst_36 : f32 to vector<4x1x128xf32>
    %66 = arith.subf %65, %64 : vector<4x1x128xf32>
    %67 = arith.mulf %63, %66 : vector<4x1x128xf32>
    %68 = vector.broadcast %67 : vector<4x1x128xf32> to vector<4x8x128xf32>
    %69 = arith.mulf %60, %68 : vector<4x8x128xf32>
    %70 = vector.shape_cast %69 : vector<4x8x128xf32> to vector<32x128xf32>
    %cst_37 = arith.constant 0.000000e+00 : f32
    %71 = vector.broadcast %cst_37 : f32 to vector<1x128xf32>
    %72 = arith.cmpf ogt, %5, %71 : vector<1x128xf32>
    %cst_38 = arith.constant -1.000000e+09 : f32
    %73 = vector.shape_cast %72 : vector<1x128xi1> to vector<1x128xi1>
    %74 = vector.broadcast %73 : vector<1x128xi1> to vector<32x128xi1>
    %75 = vector.broadcast %cst_38 : f32 to vector<32x128xf32>
    %76 = arith.select %74, %15, %75 : vector<32x128xi1>, vector<32x128xf32>
    %cst_39 = arith.constant dense<0xFF800000> : vector<32xf32>
    %77 = vector.multi_reduction <maximumf>, %76, %cst_39 [1] : vector<32x128xf32> to vector<32xf32>
    %78 = vector.shape_cast %77 : vector<32xf32> to vector<32x1xf32>
    %79 = vector.broadcast %78 : vector<32x1xf32> to vector<32x128xf32>
    %80 = arith.subf %76, %79 : vector<32x128xf32>
    %81 = math.exp %80 : vector<32x128xf32>
    %cst_40 = arith.constant dense<0.000000e+00> : vector<32xf32>
    %82 = vector.multi_reduction <add>, %81, %cst_40 [1] : vector<32x128xf32> to vector<32xf32>
    %83 = vector.shape_cast %82 : vector<32xf32> to vector<32x1xf32>
    %84 = tpu.reciprocal %83 {approx = true} : vector<32x1xf32> -> vector<32x1xf32>
    %85 = arith.mulf %83, %84 : vector<32x1xf32>
    %cst_41 = arith.constant 2.000000e+00 : f32
    %86 = vector.broadcast %cst_41 : f32 to vector<32x1xf32>
    %87 = arith.subf %86, %85 : vector<32x1xf32>
    %88 = arith.mulf %84, %87 : vector<32x1xf32>
    %89 = vector.broadcast %88 : vector<32x1xf32> to vector<32x128xf32>
    %90 = arith.mulf %81, %89 : vector<32x128xf32>
    %cst_42 = arith.constant dense<0.000000e+00> : vector<32x32xf32>
    %91 = tpu.matmul %54, %90, %cst_42 {dimension_numbers = #tpu.dot_dimension_numbers<[1], [1], [0], [0], [0, 0, 1, 0], [], []>} : vector<32x128xf32>, vector<32x128xf32>, vector<32x32xf32> -> vector<32x32xf32>
    %c256 = arith.constant 256 : index
    %c0_43 = arith.constant 0 : index
    %92 = vector.load %arg4[%c256, %c0_43] : memref<296x32xf32, #tpu.memory_space<vmem>>, vector<32x32xf32>
    %93 = arith.mulf %91, %92 : vector<32x32xf32>
    %cst_44 = arith.constant dense<0.000000e+00> : vector<32x128xf32>
    %94 = tpu.matmul %93, %70, %cst_44 {dimension_numbers = #tpu.dot_dimension_numbers<[1], [0], [0], [1], [0, 0, 1, 1], [], []>} : vector<32x32xf32>, vector<32x128xf32>, vector<32x128xf32> -> vector<32x128xf32>
    %c224 = arith.constant 224 : index
    %c0_45 = arith.constant 0 : index
    %95 = vector.load %arg4[%c224, %c0_45] : memref<296x32xf32, #tpu.memory_space<vmem>>, vector<32x32xf32>
    %cst_46 = arith.constant dense<0.000000e+00> : vector<32x128xf32>
    %96 = tpu.matmul %95, %94, %cst_46 {dimension_numbers = #tpu.dot_dimension_numbers<[1], [0], [0], [1], [0, 0, 1, 1], [], []>} : vector<32x32xf32>, vector<32x128xf32>, vector<32x128xf32> -> vector<32x128xf32>
    %97 = arith.addf %96, %50 : vector<32x128xf32>
    %cst_47 = arith.constant dense<0.000000e+00> : vector<128xf32>
    %98 = vector.multi_reduction <add>, %97, %cst_47 [0] : vector<32x128xf32> to vector<128xf32>
    %99 = vector.shape_cast %98 : vector<128xf32> to vector<1x128xf32>
    %cst_48 = arith.constant 3.200000e+01 : f32
    %100 = vector.broadcast %cst_48 : f32 to vector<1x128xf32>
    %101 = arith.divf %99, %100 : vector<1x128xf32>
    %102 = vector.broadcast %101 : vector<1x128xf32> to vector<32x128xf32>
    %103 = arith.subf %97, %102 : vector<32x128xf32>
    %104 = arith.mulf %103, %103 : vector<32x128xf32>
    %cst_49 = arith.constant dense<0.000000e+00> : vector<128xf32>
    %105 = vector.multi_reduction <add>, %104, %cst_49 [0] : vector<32x128xf32> to vector<128xf32>
    %106 = vector.shape_cast %105 : vector<128xf32> to vector<1x128xf32>
    %cst_50 = arith.constant 3.200000e+01 : f32
    %107 = vector.broadcast %cst_50 : f32 to vector<1x128xf32>
    %108 = arith.divf %106, %107 : vector<1x128xf32>
    %cst_51 = arith.constant 9.99999974E-6 : f32
    %109 = vector.broadcast %cst_51 : f32 to vector<1x128xf32>
    %110 = arith.addf %108, %109 : vector<1x128xf32>
    %111 = math.rsqrt %110 : vector<1x128xf32>
    %112 = vector.broadcast %111 : vector<1x128xf32> to vector<32x128xf32>
    %113 = arith.mulf %103, %112 : vector<32x128xf32>
    %c0_52 = arith.constant 0 : index
    %c6 = arith.constant 6 : index
    %114 = vector.load %arg6[%c0_52, %c6] : memref<32x9xf32, #tpu.memory_space<vmem>>, vector<32x1xf32>
    %115 = vector.broadcast %114 : vector<32x1xf32> to vector<32x128xf32>
    %116 = arith.mulf %113, %115 : vector<32x128xf32>
    %c0_53 = arith.constant 0 : index
    %c7 = arith.constant 7 : index
    %117 = vector.load %arg6[%c0_53, %c7] : memref<32x9xf32, #tpu.memory_space<vmem>>, vector<32x1xf32>
    %118 = vector.broadcast %117 : vector<32x1xf32> to vector<32x128xf32>
    %119 = arith.addf %116, %118 : vector<32x128xf32>
    %c288 = arith.constant 288 : index
    %c0_54 = arith.constant 0 : index
    %120 = vector.load %arg4[%c288, %c0_54] : memref<296x32xf32, #tpu.memory_space<vmem>>, vector<8x32xf32>
    %cst_55 = arith.constant dense<0.000000e+00> : vector<8x128xf32>
    %121 = tpu.matmul %120, %119, %cst_55 {dimension_numbers = #tpu.dot_dimension_numbers<[1], [0], [0], [1], [0, 0, 1, 1], [], []>} : vector<8x32xf32>, vector<32x128xf32>, vector<8x128xf32> -> vector<8x128xf32>
    %c0_56 = arith.constant 0 : index
    %c8 = arith.constant 8 : index
    %122 = vector.load %arg6[%c0_56, %c8] : memref<32x9xf32, #tpu.memory_space<vmem>>, vector<1x1xf32>
    %123 = vector.extract_strided_slice %121 {offsets = [0, 0], sizes = [1, 128], strides = [1, 1]} : vector<8x128xf32> to vector<1x128xf32>
    %124 = vector.broadcast %122 : vector<1x1xf32> to vector<1x128xf32>
    %125 = arith.addf %123, %124 : vector<1x128xf32>
    %c0_57 = arith.constant 0 : index
    %c0_58 = arith.constant 0 : index
    %c0_59 = arith.constant 0 : index
    %126 = vector.load %arg7[%c0_57, %c0_58, %c0_59] : memref<1x1x128xf32, #tpu.memory_space<vmem>>, vector<1x1x128xf32>
    %127 = vector.shape_cast %126 : vector<1x1x128xf32> to vector<1x128xf32>
    %128 = vector.shape_cast %125 : vector<1x128xf32> to vector<1x1x128xf32>
    tpu.vector_store %arg7[%c0_57, %c0_58, %c0_59], %128 {strides = array<i32>} : memref<1x1x128xf32, #tpu.memory_space<vmem>>, vector<1x1x128xf32>,
    return
  }
  func.func @transform_0(%arg0: i32) -> (i32, i32, i32) {
    %c0_i32 = arith.constant 0 : i32
    %c0_i32_0 = arith.constant 0 : i32
    %c0_i32_1 = arith.constant 0 : i32
    return %arg0, %c0_i32, %c0_i32_0 : i32, i32, i32
  }
  func.func @transform_1(%arg0: i32) -> (i32, i32, i32) {
    %c0_i32 = arith.constant 0 : i32
    %c0_i32_0 = arith.constant 0 : i32
    %c0_i32_1 = arith.constant 0 : i32
    return %arg0, %c0_i32, %c0_i32_0 : i32, i32, i32
  }
  func.func @transform_2(%arg0: i32) -> (i32, i32, i32) {
    %c0_i32 = arith.constant 0 : i32
    %c0_i32_0 = arith.constant 0 : i32
    %c0_i32_1 = arith.constant 0 : i32
    return %arg0, %c0_i32, %c0_i32_0 : i32, i32, i32
  }
  func.func @transform_3(%arg0: i32) -> (i32, i32) {
    %c0_i32 = arith.constant 0 : i32
    %c0_i32_0 = arith.constant 0 : i32
    %c0_i32_1 = arith.constant 0 : i32
    return %c0_i32, %c0_i32_0 : i32, i32
  }
  func.func @transform_4(%arg0: i32) -> (i32, i32) {
    %c0_i32 = arith.constant 0 : i32
    %c0_i32_0 = arith.constant 0 : i32
    %c0_i32_1 = arith.constant 0 : i32
    return %c0_i32, %c0_i32_0 : i32, i32
  }
  func.func @transform_5(%arg0: i32) -> (i32, i32) {
    %c0_i32 = arith.constant 0 : i32
    %c0_i32_0 = arith.constant 0 : i32
    %c0_i32_1 = arith.constant 0 : i32
    return %c0_i32, %c0_i32_0 : i32, i32
  }
  func.func @transform_6(%arg0: i32) -> (i32, i32, i32) {
    %c0_i32 = arith.constant 0 : i32
    %c0_i32_0 = arith.constant 0 : i32
    %c0_i32_1 = arith.constant 0 : i32
    return %arg0, %c0_i32, %c0_i32_0 : i32, i32, i32
  }
}

</mosaic_0001>

<llo_original>
// kernel: vl_mod_attention.1
$region0: #{vl_mod_attention.1}
  #allocation0 [shape = 'u32[]', space=smem, size = 0x4, offset = 0x4, fixed_abs, tag = 'smem constant byte address 0x4 - core index']
  #allocation1 [shape = 'u32[72,128]{1,0:T(1,128)}', space=vmem, size = 0x9000, scoped, tag = 'internal scratch']
  %s0 = inlined_call_operand.vmem [shape: f32[2,32,128], index: 0, kind: input, shape index: {}]
  %s1 = inlined_call_operand.vmem [shape: f32[2,48,128], index: 1, kind: input, shape index: {}]
  %s2 = inlined_call_operand.vmem [shape: f32[2,1,128], index: 2, kind: input, shape index: {}]
  %s3 = inlined_call_operand.vmem [shape: f32[296,32], index: 3, kind: input, shape index: {}]
  %s4 = inlined_call_operand.vmem [shape: f32[64,48], index: 4, kind: input, shape index: {}]
  %s5 = inlined_call_operand.vmem [shape: f32[32,9], index: 5, kind: input, shape index: {}]
  %s6 = inlined_call_operand.hbm [shape: f32[2,1,128], index: 6, kind: output, shape index: {}]
  %s7 = sld [smem:[#allocation0]]
  $region57: #{vl_mod_attention.1} parent=0
    _
  %s9 = ssub.s32 1, %s7
  %s10 = scalar_select 0, %s9, %s7
  $region1: #{vl_mod_attention.1} parent=0
    #allocation2 [shape = 'u8[1024]{0}', space=vmem, size = 0x400, scoped, tag = 'output window, operand 0']
    #allocation3 [shape = 's32[2]{0}', space=sflag, size = 0x8, scoped, tag = 'scoped memory for vl_mod_attention.1']
    %11 = vsyncpa [#allocation3], 0
    %s12 = scalar_lea.sflag [#allocation3], 1
    %13 = vsyncpa %s12, 0
    loop: start=0, step=1, limit=4
    $region2: #{vl_mod_attention.1} parent=1 // loop_pre_header
      _
    $region3: #{vl_mod_attention.1} parent=1 // loop_header
      %s15 = sphi 0, %s19
      %p16 = scmp.ge.s32.totalorder %s15, 4
      %s25 = sphi 0, %s27
      %s28 = sphi 0, %s25
      %s29 = sphi 0, %s28
      %s45 = sphi 0, %s29
      %s51 = sphi 0, %s53
      %s54 = sphi 0, %s51
      %s55 = sphi 0, %s54
      %s71 = sphi 0, %s55
      %s77 = sphi 0, %s79
      %s80 = sphi 0, %s77
      %s81 = sphi 0, %s80
      %s97 = sphi 0, %s81
      %s101 = sphi 0, %s101
      %s103 = sphi 0, %s101
      %s104 = sphi 0, %s103
      %s118 = sphi 0, %s104
      %s122 = sphi 0, %s122
      %s124 = sphi 0, %s122
      %s125 = sphi 0, %s124
      %s139 = sphi 0, %s125
      %s143 = sphi 0, %s143
      %s145 = sphi 0, %s143
      %s146 = sphi 0, %s145
      %s160 = sphi 0, %s146
      %s166 = sphi 0, %s168
      %s169 = sphi 0, %s166
      %s170 = sphi 0, %s169
      %s186 = sphi 0, %s170
    $region4: #{vl_mod_attention.1} parent=1 // loop_header_branch
      %18 = sbr.rel (%p16) target = $region8
    $region5: #{vl_mod_attention.1} parent=1 // loop_body
      %s20 = ssub.s32 %s15, 1
      %s21 = ssub.s32 %s15, 2
      %s22 = sadd.s32 %s15, 1
      %s23 = ssub.s32 %s15, %s22
      %p24 = scmp.eq.s32.totalorder %s23, 0
      %s26 = sadd.s32 %s25, 1
      %s27 = scalar_select %p24, %s25, %s26
      %p30 = pneg %p24
      %p31 = scmp.eq.s32.totalorder %s15, 1
      %p32 = por %p30, %p31
      %p33 = scmp.ne.s32.totalorder %s25, %s28
      %p34 = scmp.eq.s32.totalorder %s15, 0
      %p35 = por %p33, %p34
      %p36 = scmp.ne.s32.totalorder %s25, %s28
      %p37 = scmp.eq.s32.totalorder %s20, 1
      %p38 = por %p36, %p37
      %p39 = scmp.ne.s32.totalorder %s28, %s29
      %p40 = scmp.eq.s32.totalorder %s20, 0
      %p41 = por %p39, %p40
      %p42 = scmp.ne.s32.totalorder %s28, %s29
      %p43 = scmp.eq.s32.totalorder %s21, 1
      %p44 = por %p42, %p43
      %p46 = scmp.ne.s32.totalorder %s29, %s45
      %p47 = scmp.eq.s32.totalorder %s21, 0
      %p48 = por %p46, %p47
      %s49 = ssub.s32 %s15, %s22
      %p50 = scmp.eq.s32.totalorder %s49, 0
      %s52 = sadd.s32 %s51, 1
      %s53 = scalar_select %p50, %s51, %s52
      %p56 = pneg %p50
      %p57 = scmp.eq.s32.totalorder %s15, 1
      %p58 = por %p56, %p57
      %p59 = scmp.ne.s32.totalorder %s51, %s54
      %p60 = scmp.eq.s32.totalorder %s15, 0
      %p61 = por %p59, %p60
      %p62 = scmp.ne.s32.totalorder %s51, %s54
      %p63 = scmp.eq.s32.totalorder %s20, 1
      %p64 = por %p62, %p63
      %p65 = scmp.ne.s32.totalorder %s54, %s55
      %p66 = scmp.eq.s32.totalorder %s20, 0
      %p67 = por %p65, %p66
      %p68 = scmp.ne.s32.totalorder %s54, %s55
      %p69 = scmp.eq.s32.totalorder %s21, 1
      %p70 = por %p68, %p69
      %p72 = scmp.ne.s32.totalorder %s55, %s71
      %p73 = scmp.eq.s32.totalorder %s21, 0
      %p74 = por %p72, %p73
      %s75 = ssub.s32 %s15, %s22
      %p76 = scmp.eq.s32.totalorder %s75, 0
      %s78 = sadd.s32 %s77, 1
      %s79 = scalar_select %p76, %s77, %s78
      %p82 = pneg %p76
      %p83 = scmp.eq.s32.totalorder %s15, 1
      %p84 = por %p82, %p83
      %p85 = scmp.ne.s32.totalorder %s77, %s80
      %p86 = scmp.eq.s32.totalorder %s15, 0
      %p87 = por %p85, %p86
      %p88 = scmp.ne.s32.totalorder %s77, %s80
      %p89 = scmp.eq.s32.totalorder %s20, 1
      %p90 = por %p88, %p89
      %p91 = scmp.ne.s32.totalorder %s80, %s81
      %p92 = scmp.eq.s32.totalorder %s20, 0
      %p93 = por %p91, %p92
      %p94 = scmp.ne.s32.totalorder %s80, %s81
      %p95 = scmp.eq.s32.totalorder %s21, 1
      %p96 = por %p94, %p95
      %p98 = scmp.ne.s32.totalorder %s81, %s97
      %p99 = scmp.eq.s32.totalorder %s21, 0
      %p100 = por %p98, %p99
      %s102 = sadd.s32 %s101, 1
      %p105 = scmp.eq.s32.totalorder %s15, 1
      %p106 = scmp.ne.s32.totalorder %s101, %s103
      %p107 = scmp.eq.s32.totalorder %s15, 0
      %p108 = por %p106, %p107
      %p109 = scmp.ne.s32.totalorder %s101, %s103
      %p110 = scmp.eq.s32.totalorder %s20, 1
      %p111 = por %p109, %p110
      %p112 = scmp.ne.s32.totalorder %s103, %s104
      %p113 = scmp.eq.s32.totalorder %s20, 0
      %p114 = por %p112, %p113
      %p115 = scmp.ne.s32.totalorder %s103, %s104
      %p116 = scmp.eq.s32.totalorder %s21, 1
      %p117 = por %p115, %p116
      %p119 = scmp.ne.s32.totalorder %s104, %s118
      %p120 = scmp.eq.s32.totalorder %s21, 0
      %p121 = por %p119, %p120
      %s123 = sadd.s32 %s122, 1
      %p126 = scmp.eq.s32.totalorder %s15, 1
      %p127 = scmp.ne.s32.totalorder %s122, %s124
      %p128 = scmp.eq.s32.totalorder %s15, 0
      %p129 = por %p127, %p128
      %p130 = scmp.ne.s32.totalorder %s122, %s124
      %p131 = scmp.eq.s32.totalorder %s20, 1
      %p132 = por %p130, %p131
      %p133 = scmp.ne.s32.totalorder %s124, %s125
      %p134 = scmp.eq.s32.totalorder %s20, 0
      %p135 = por %p133, %p134
      %p136 = scmp.ne.s32.totalorder %s124, %s125
      %p137 = scmp.eq.s32.totalorder %s21, 1
      %p138 = por %p136, %p137
      %p140 = scmp.ne.s32.totalorder %s125, %s139
      %p141 = scmp.eq.s32.totalorder %s21, 0
      %p142 = por %p140, %p141
      %s144 = sadd.s32 %s143, 1
      %p147 = scmp.eq.s32.totalorder %s15, 1
      %p148 = scmp.ne.s32.totalorder %s143, %s145
      %p149 = scmp.eq.s32.totalorder %s15, 0
      %p150 = por %p148, %p149
      %p151 = scmp.ne.s32.totalorder %s143, %s145
      %p152 = scmp.eq.s32.totalorder %s20, 1
      %p153 = por %p151, %p152
      %p154 = scmp.ne.s32.totalorder %s145, %s146
      %p155 = scmp.eq.s32.totalorder %s20, 0
      %p156 = por %p154, %p155
      %p157 = scmp.ne.s32.totalorder %s145, %s146
      %p158 = scmp.eq.s32.totalorder %s21, 1
      %p159 = por %p157, %p158
      %p161 = scmp.ne.s32.totalorder %s146, %s160
      %p162 = scmp.eq.s32.totalorder %s21, 0
      %p163 = por %p161, %p162
      %s164 = ssub.s32 %s15, %s22
      %p165 = scmp.eq.s32.totalorder %s164, 0
      %s167 = sadd.s32 %s166, 1
      %s168 = scalar_select %p165, %s166, %s167
      %p171 = pneg %p165
      %p172 = scmp.eq.s32.totalorder %s15, 1
      %p173 = por %p171, %p172
      %p174 = scmp.ne.s32.totalorder %s166, %s169
      %p175 = scmp.eq.s32.totalorder %s15, 0
      %p176 = por %p174, %p175
      %p177 = scmp.ne.s32.totalorder %s166, %s169
      %p178 = scmp.eq.s32.totalorder %s20, 1
      %p179 = por %p177, %p178
      %p180 = scmp.ne.s32.totalorder %s169, %s170
      %p181 = scmp.eq.s32.totalorder %s20, 0
      %p182 = por %p180, %p181
      %p183 = scmp.ne.s32.totalorder %s169, %s170
      %p184 = scmp.eq.s32.totalorder %s21, 1
      %p185 = por %p183, %p184
      %p187 = scmp.ne.s32.totalorder %s170, %s186
      %p188 = scmp.eq.s32.totalorder %s21, 0
      %p189 = por %p187, %p188
      %p190 = scmp.le.s32.totalorder 1, %s15
      %p191 = scmp.lt.s32.totalorder %s15, 3
      %p192 = pnand %p190, %p191
      %p193 = pneg %p192
      // Predicated region
      $region9: #{vl_mod_attention.1} parent=5 // pred_check
        _
      $region10: #{vl_mod_attention.1} parent=5 // pred_check_branch
        %195 = sbr.rel (%p192) target = $region12
      $region11: #{vl_mod_attention.1} parent=5 // pred_region
        %s196 = ssub.s32 %s15, 1
        // Predicated region
        $region13: #{vl_mod_attention.1} parent=11 // pred_check
          %p197 = pneg %p114
        $region14: #{vl_mod_attention.1} parent=11 // pred_check_branch
          %199 = sbr.rel (%p197) target = $region16
        $region15: #{vl_mod_attention.1} parent=11 // pred_region
          _
        $region16: #{vl_mod_attention.1} parent=11 // pred_fallthru
          _
        // Predicated region
        $region17: #{vl_mod_attention.1} parent=11 // pred_check
          %p200 = pneg %p135
        $region18: #{vl_mod_attention.1} parent=11 // pred_check_branch
          %202 = sbr.rel (%p200) target = $region20
        $region19: #{vl_mod_attention.1} parent=11 // pred_region
          _
        $region20: #{vl_mod_attention.1} parent=11 // pred_fallthru
          _
        // Predicated region
        $region21: #{vl_mod_attention.1} parent=11 // pred_check
          %p203 = pneg %p156
        $region22: #{vl_mod_attention.1} parent=11 // pred_check_branch
          %205 = sbr.rel (%p203) target = $region24
        $region23: #{vl_mod_attention.1} parent=11 // pred_region
          _
        $region24: #{vl_mod_attention.1} parent=11 // pred_fallthru
          _
      $region12: #{vl_mod_attention.1} parent=5 // pred_fallthru
        _
      %p206 = scmp.lt.s32.totalorder %s15, 2
      // Predicated region
      $region25: #{vl_mod_attention.1} parent=5 // pred_check
        %p207 = pneg %p206
      $region26: #{vl_mod_attention.1} parent=5 // pred_check_branch
        %209 = sbr.rel (%p207) target = $region28
      $region27: #{vl_mod_attention.1} parent=5 // pred_region
        // Predicated region
        $region29: #{vl_mod_attention.1} parent=27 // pred_check
          %p210 = pneg %p35
        $region30: #{vl_mod_attention.1} parent=27 // pred_check_branch
          %212 = sbr.rel (%p210) target = $region32
        $region31: #{vl_mod_attention.1} parent=27 // pred_region
          %p213 = scmp.lt.s32.totalorder %s15, 1
          %s214 = scalar_select %p213, %s15, 1
          %s215 = smul.addr %s214, 4
          %s216 = smul.addr %s215, 8
          %s217 = scalar_lea.vmem %s0, %s216
        $region32: #{vl_mod_attention.1} parent=27 // pred_fallthru
          _
        // Predicated region
        $region33: #{vl_mod_attention.1} parent=27 // pred_check
          %p218 = pneg %p61
        $region34: #{vl_mod_attention.1} parent=27 // pred_check_branch
          %220 = sbr.rel (%p218) target = $region36
        $region35: #{vl_mod_attention.1} parent=27 // pred_region
          %p221 = scmp.lt.s32.totalorder %s15, 1
          %s222 = scalar_select %p221, %s15, 1
          %s223 = smul.addr %s222, 6
          %s224 = smul.addr %s223, 8
          %s225 = scalar_lea.vmem %s1, %s224
        $region36: #{vl_mod_attention.1} parent=27 // pred_fallthru
          _
        // Predicated region
        $region37: #{vl_mod_attention.1} parent=27 // pred_check
          %p226 = pneg %p87
        $region38: #{vl_mod_attention.1} parent=27 // pred_check_branch
          %228 = sbr.rel (%p226) target = $region40
        $region39: #{vl_mod_attention.1} parent=27 // pred_region
          %p229 = scmp.lt.s32.totalorder %s15, 1
          %s230 = scalar_select %p229, %s15, 1
          %s231 = scalar_lea.vmem %s2, %s230
        $region40: #{vl_mod_attention.1} parent=27 // pred_fallthru
          _
      $region28: #{vl_mod_attention.1} parent=5 // pred_fallthru
        _
      %p232 = scmp.le.s32.totalorder 1, %s15
      %p233 = scmp.lt.s32.totalorder %s15, 3
      %p234 = pnand %p232, %p233
      %p235 = pneg %p234
      // Predicated region
      $region41: #{vl_mod_attention.1} parent=5 // pred_check
        _
      $region42: #{vl_mod_attention.1} parent=5 // pred_check_branch
        %237 = sbr.rel (%p234) target = $region44
      $region43: #{vl_mod_attention.1} parent=5 // pred_region
        %s238 = ssub.s32 %s15, 1
        %p239 = scmp.lt.s32.totalorder %s20, 1
        %s240 = scalar_select %p239, %s20, 1
        %s241 = smul.addr %s240, 4
        %s242 = smul.addr %s241, 8
        %s243 = scalar_lea.vmem %s0, %s242
        %p244 = pneg %p41
        %p245 = pneg %p38
        %p246 = scmp.lt.s32.totalorder %s20, 1
        %s247 = scalar_select %p246, %s20, 1
        %s248 = smul.addr %s247, 6
        %s249 = smul.addr %s248, 8
        %s250 = scalar_lea.vmem %s1, %s249
        %p251 = pneg %p67
        %p252 = pneg %p64
        %p253 = scmp.lt.s32.totalorder %s20, 1
        %s254 = scalar_select %p253, %s20, 1
        %s255 = scalar_lea.vmem %s2, %s254
        %p256 = pneg %p93
        %p257 = pneg %p90
        %p258 = pneg %p114
        %p259 = pneg %p111
        %p260 = pneg %p135
        %p261 = pneg %p132
        %p262 = pneg %p156
        %p263 = pneg %p153
        %p264 = pneg %p182
        %p265 = pneg %p179
        %s266 = sand.u32 %s169, 1
        %s267 = scalar_lea.sflag [#allocation3], %s266
        %s268 = sand.u32 %s169, 1
        %s269 = scalar_lea.vmem [#allocation2], %s268
        %p270 = scmp.lt.s32.totalorder %s20, 1
        %s271 = scalar_select %p270, %s20, 1
        %s272 = smul.addr %s271, 4
        %s273 = smul.addr %s272, 8
        %s274 = scalar_lea.vmem %s0, %s273
        %p275 = scmp.lt.s32.totalorder %s20, 1
        %s276 = scalar_select %p275, %s20, 1
        %s277 = smul.addr %s276, 6
        %s278 = smul.addr %s277, 8
        %s279 = scalar_lea.vmem %s1, %s278
        %p280 = scmp.lt.s32.totalorder %s20, 1
        %s281 = scalar_select %p280, %s20, 1
        %s282 = scalar_lea.vmem %s2, %s281
        %v283 = vld [vmem:[%s274] sm:$0xff]
        %v284 = vld [vmem:[%s274 + $0x8] sm:$0xff]
        %v285 = vld [vmem:[%s274 + $0x10] sm:$0xff]
        %v286 = vld [vmem:[%s274 + $0x18] sm:$0xff]
        %v287 = vld [vmem:[%s279] sm:$0xff]
        %v288 = vld [vmem:[%s279 + $0x8] sm:$0xff]
        %v289 = vld [vmem:[%s279 + $0x10] sm:$0xff]
        %v290 = vld [vmem:[%s279 + $0x18] sm:$0xff]
        %v291 = vld [vmem:[%s279 + $0x20] sm:$0xff]
        %v292 = vld [vmem:[%s279 + $0x28] sm:$0xff]
        %v293 = vld [vmem:[%s282] sm:$0x1]
        %v294 = vld [vmem:[%s4] sm:$0xff]
        %v295 = vld [vmem:[%s4 + $0x8] sm:$0xff]
        %v296 = vld [vmem:[%s4 + $0x10] sm:$0xff]
        %v297 = vld [vmem:[%s4 + $0x18] sm:$0xff]
        %v298 = vld [vmem:[%s4 + $0x20] sm:$0xff]
        %v299 = vld [vmem:[%s4 + $0x28] sm:$0xff]
        %v300 = vld [vmem:[%s4 + $0x30] sm:$0xff]
        %v301 = vld [vmem:[%s4 + $0x38] sm:$0xff]
        %vm302 = vcmask 392192
        %v304 = vsel %vm302, %v294, 0
        %v307 = vsel %vm302, %v295, 0
        %v310 = vsel %vm302, %v296, 0
        %v313 = vsel %vm302, %v297, 0
        %v316 = vsel %vm302, %v298, 0
        %v319 = vsel %vm302, %v299, 0
        %v322 = vsel %vm302, %v300, 0
        %v325 = vsel %vm302, %v301, 0
        %327 = vmatpush.msra.mxu0 0.0
        %328 = vmatpush.msra.mxu0 0.0
        %329 = vmatpush.msra.mxu0 0.0
        %330 = vmatpush.msra.mxu0 0.0
        %331 = vmatpush.msra.mxu0 0.0
        %332 = vmatpush.msra.mxu0 0.0
        %333 = vmatpush.msra.mxu0 0.0
        %334 = vmatpush.msra.mxu0 0.0
        %335 = vmatpush.msra.mxu0 0.0
        %336 = vmatpush.msra.mxu0 0.0
        %337 = vmatpush.msra.mxu0 %v292
        %338 = vmatpush.msra.mxu0 %v291
        %339 = vmatpush.msra.mxu0 %v290
        %340 = vmatpush.msra.mxu0 %v289
        %341 = vmatpush.msra.mxu0 %v288
        %342 = vmatpush.msra.mxu0 %v287
        %343 = vmatmul.f32.gmra.mxu0 %v304
        %v344 = vpop.f32.mrf.mxu0
        %v345 = vadd.f32 0.0, %v344
        %346 = vmatmul.f32.gmra.mxu0 %v307
        %v347 = vpop.f32.mrf.mxu0
        %v348 = vadd.f32 0.0, %v347
        %349 = vmatmul.f32.gmra.mxu0 %v310
        %v350 = vpop.f32.mrf.mxu0
        %v351 = vadd.f32 0.0, %v350
        %352 = vmatmul.f32.gmra.mxu0 %v313
        %v353 = vpop.f32.mrf.mxu0
        %v354 = vadd.f32 0.0, %v353
        %355 = vmatmul.f32.gmra.mxu0 %v316
        %v356 = vpop.f32.mrf.mxu0
        %v357 = vadd.f32 0.0, %v356
        %358 = vmatmul.f32.gmra.mxu0 %v319
        %v359 = vpop.f32.mrf.mxu0
        %v360 = vadd.f32 0.0, %v359
        %361 = vmatmul.f32.gmra.mxu0 %v322
        %v362 = vpop.f32.mrf.mxu0
        %v363 = vadd.f32 0.0, %v362
        %364 = vmatmul.f32.gmra.mxu0 %v325
        %v365 = vpop.f32.mrf.mxu0
        %v366 = vadd.f32 0.0, %v365
        %367 = vdwg.mxu0
        %v368 = vld [vmem:[%s5] sm:$0xff]
        %v369 = vld [vmem:[%s5 + $0x8] sm:$0xff]
        %v370 = vld [vmem:[%s5 + $0x10] sm:$0xff]
        %v371 = vld [vmem:[%s5 + $0x18] sm:$0xff]
        %373 = vset.pattern.permute.xlu0 0
        %374 = vperm.xlu0 %373, %v368
        %v375 = vpop.permute.xlu0 %374
        %378 = vset.pattern.permute.xlu0 0
        %379 = vperm.xlu0 %378, %v369
        %v380 = vpop.permute.xlu0 %379
        %383 = vset.pattern.permute.xlu0 0
        %384 = vperm.xlu0 %383, %v370
        %v385 = vpop.permute.xlu0 %384
        %388 = vset.pattern.permute.xlu0 0
        %389 = vperm.xlu0 %388, %v371
        %v390 = vpop.permute.xlu0 %389
        %v392 = vadd.f32 %v345, %v375
        %v393 = vadd.f32 %v348, %v380
        %v394 = vadd.f32 %v351, %v385
        %v395 = vadd.f32 %v354, %v390
        %396 = vset.pattern.permute.xlu0 5
        %397 = vperm.xlu0 %396, %v368
        %v398 = vpop.permute.xlu0 %397
        %400 = vset.pattern.permute.xlu0 5
        %401 = vperm.xlu0 %400, %v369
        %v402 = vpop.permute.xlu0 %401
        %404 = vset.pattern.permute.xlu0 5
        %405 = vperm.xlu0 %404, %v370
        %v406 = vpop.permute.xlu0 %405
        %408 = vset.pattern.permute.xlu0 5
        %409 = vperm.xlu0 %408, %v371
        %v410 = vpop.permute.xlu0 %409
        %v412 = vadd.f32 %v357, %v398
        %v413 = vadd.f32 %v360, %v402
        %v414 = vadd.f32 %v363, %v406
        %v415 = vadd.f32 %v366, %v410
        %v416 = vld [vmem:[%s3] sm:$0xff]
        %v417 = vld [vmem:[%s3 + $0x8] sm:$0xff]
        %v418 = vld [vmem:[%s3 + $0x10] sm:$0xff]
        %v419 = vld [vmem:[%s3 + $0x18] sm:$0xff]
        %420 = vset.pattern.permute.xlu0 1
        %421 = vperm.xlu0 %420, %v368
        %v422 = vpop.permute.xlu0 %421
        %424 = vset.pattern.permute.xlu0 1
        %425 = vperm.xlu0 %424, %v369
        %v426 = vpop.permute.xlu0 %425
        %428 = vset.pattern.permute.xlu0 1
        %429 = vperm.xlu0 %428, %v370
        %v430 = vpop.permute.xlu0 %429
        %432 = vset.pattern.permute.xlu0 1
        %433 = vperm.xlu0 %432, %v371
        %v434 = vpop.permute.xlu0 %433
        %vm436 = vcmask 261120
        %v438 = vsel %vm436, %v416, 0
        %v441 = vsel %vm436, %v417, 0
        %v444 = vsel %vm436, %v418, 0
        %v447 = vsel %vm436, %v419, 0
        %449 = vmatpush.msra.mxu0 0.0
        %450 = vmatpush.msra.mxu0 0.0
        %451 = vmatpush.msra.mxu0 0.0
        %452 = vmatpush.msra.mxu0 0.0
        %453 = vmatpush.msra.mxu0 0.0
        %454 = vmatpush.msra.mxu0 0.0
        %455 = vmatpush.msra.mxu0 0.0
        %456 = vmatpush.msra.mxu0 0.0
        %457 = vmatpush.msra.mxu0 0.0
        %458 = vmatpush.msra.mxu0 0.0
        %459 = vmatpush.msra.mxu0 0.0
        %460 = vmatpush.msra.mxu0 0.0
        %461 = vmatpush.msra.mxu0 %v286
        %462 = vmatpush.msra.mxu0 %v285
        %463 = vmatpush.msra.mxu0 %v284
        %464 = vmatpush.msra.mxu0 %v283
        %465 = vmatmul.f32.gmra.mxu0 %v438
        %v466 = vpop.f32.mrf.mxu0
        %v467 = vadd.f32 %v422, %v466
        %468 = vmatmul.f32.gmra.mxu0 %v441
        %v469 = vpop.f32.mrf.mxu0
        %v470 = vadd.f32 %v426, %v469
        %471 = vmatmul.f32.gmra.mxu0 %v444
        %v472 = vpop.f32.mrf.mxu0
        %v473 = vadd.f32 %v430, %v472
        %474 = vmatmul.f32.gmra.mxu0 %v447
        %v475 = vpop.f32.mrf.mxu0
        %v476 = vadd.f32 %v434, %v475
        %477 = vdwg.mxu0
        %v478 = vmul.f32 %v467, %v392
        %v479 = vmul.f32 %v470, %v393
        %v480 = vmul.f32 %v473, %v394
        %v481 = vmul.f32 %v476, %v395
        %v482 = vmax.f32 %v478, 0.0
        %v483 = vmax.f32 %v479, 0.0
        %v484 = vmax.f32 %v480, 0.0
        %v485 = vmax.f32 %v481, 0.0
        %v486 = vld [vmem:[%s3 + $0x20] sm:$0xff]
        %v487 = vld [vmem:[%s3 + $0x28] sm:$0xff]
        %v488 = vld [vmem:[%s3 + $0x30] sm:$0xff]
        %v489 = vld [vmem:[%s3 + $0x38] sm:$0xff]
        %490 = vset.pattern.permute.xlu0 2
        %491 = vperm.xlu0 %490, %v368
        %v492 = vpop.permute.xlu0 %491
        %494 = vset.pattern.permute.xlu0 2
        %495 = vperm.xlu0 %494, %v369
        %v496 = vpop.permute.xlu0 %495
        %498 = vset.pattern.permute.xlu0 2
        %499 = vperm.xlu0 %498, %v370
        %v500 = vpop.permute.xlu0 %499
        %502 = vset.pattern.permute.xlu0 2
        %503 = vperm.xlu0 %502, %v371
        %v504 = vpop.permute.xlu0 %503
        %v507 = vsel %vm436, %v486, 0
        %v510 = vsel %vm436, %v487, 0
        %v513 = vsel %vm436, %v488, 0
        %v516 = vsel %vm436, %v489, 0
        %518 = vmatpush.msra.mxu0 0.0
        %519 = vmatpush.msra.mxu0 0.0
        %520 = vmatpush.msra.mxu0 0.0
        %521 = vmatpush.msra.mxu0 0.0
        %522 = vmatpush.msra.mxu0 0.0
        %523 = vmatpush.msra.mxu0 0.0
        %524 = vmatpush.msra.mxu0 0.0
        %525 = vmatpush.msra.mxu0 0.0
        %526 = vmatpush.msra.mxu0 0.0
        %527 = vmatpush.msra.mxu0 0.0
        %528 = vmatpush.msra.mxu0 0.0
        %529 = vmatpush.msra.mxu0 0.0
        %530 = vmatpush.msra.mxu0 %v485
        %531 = vmatpush.msra.mxu0 %v484
        %532 = vmatpush.msra.mxu0 %v483
        %533 = vmatpush.msra.mxu0 %v482
        %534 = vmatmul.f32.gmra.mxu0 %v507
        %v535 = vpop.f32.mrf.mxu0
        %v536 = vadd.f32 %v492, %v535
        %537 = vmatmul.f32.gmra.mxu0 %v510
        %v538 = vpop.f32.mrf.mxu0
        %v539 = vadd.f32 %v496, %v538
        %540 = vmatmul.f32.gmra.mxu0 %v513
        %v541 = vpop.f32.mrf.mxu0
        %v542 = vadd.f32 %v500, %v541
        %543 = vmatmul.f32.gmra.mxu0 %v516
        %v544 = vpop.f32.mrf.mxu0
        %v545 = vadd.f32 %v504, %v544
        %546 = vdwg.mxu0
        %v547 = vmul.f32 %v536, %v392
        %v548 = vmul.f32 %v539, %v393
        %v549 = vmul.f32 %v542, %v394
        %v550 = vmul.f32 %v545, %v395
        %v551 = vmax.f32 %v547, 0.0
        %v552 = vmax.f32 %v548, 0.0
        %v553 = vmax.f32 %v549, 0.0
        %v554 = vmax.f32 %v550, 0.0
        %v555 = vld [vmem:[%s3 + $0x40] sm:$0xff]
        %v556 = vld [vmem:[%s3 + $0x48] sm:$0xff]
        %v557 = vld [vmem:[%s3 + $0x50] sm:$0xff]
        %v558 = vld [vmem:[%s3 + $0x58] sm:$0xff]
        %v559 = vld [vmem:[%s3 + $0x60] sm:$0xff]
        %v560 = vld [vmem:[%s3 + $0x68] sm:$0xff]
        %v561 = vld [vmem:[%s3 + $0x70] sm:$0xff]
        %v562 = vld [vmem:[%s3 + $0x78] sm:$0xff]
        %v564 = vsel %vm436, %v559, 0
        %v567 = vsel %vm436, %v560, 0
        %v570 = vsel %vm436, %v561, 0
        %v573 = vsel %vm436, %v562, 0
        %575 = vmatpush.msra.mxu0 0.0
        %576 = vmatpush.msra.mxu0 0.0
        %577 = vmatpush.msra.mxu0 0.0
        %578 = vmatpush.msra.mxu0 0.0
        %579 = vmatpush.msra.mxu0 0.0
        %580 = vmatpush.msra.mxu0 0.0
        %581 = vmatpush.msra.mxu0 0.0
        %582 = vmatpush.msra.mxu0 0.0
        %583 = vmatpush.msra.mxu0 0.0
        %584 = vmatpush.msra.mxu0 0.0
        %585 = vmatpush.msra.mxu0 0.0
        %586 = vmatpush.msra.mxu0 0.0
        %587 = vmatpush.msra.mxu0 %v554
        %588 = vmatpush.msra.mxu0 %v553
        %589 = vmatpush.msra.mxu0 %v552
        %590 = vmatpush.msra.mxu0 %v551
        %591 = vmatmul.f32.gmra.mxu0 %v564
        %v592 = vpop.f32.mrf.mxu0
        %v593 = vadd.f32 0.0, %v592
        %594 = vmatmul.f32.gmra.mxu0 %v567
        %v595 = vpop.f32.mrf.mxu0
        %v596 = vadd.f32 0.0, %v595
        %597 = vmatmul.f32.gmra.mxu0 %v570
        %v598 = vpop.f32.mrf.mxu0
        %v599 = vadd.f32 0.0, %v598
        %600 = vmatmul.f32.gmra.mxu0 %v573
        %v601 = vpop.f32.mrf.mxu0
        %v602 = vadd.f32 0.0, %v601
        %603 = vdwg.mxu0
        %v605 = vsel %vm436, %v555, 0
        %v608 = vsel %vm436, %v556, 0
        %v611 = vsel %vm436, %v557, 0
        %v614 = vsel %vm436, %v558, 0
        %616 = vmatpush.msra.mxu0 0.0
        %617 = vmatpush.msra.mxu0 0.0
        %618 = vmatpush.msra.mxu0 0.0
        %619 = vmatpush.msra.mxu0 0.0
        %620 = vmatpush.msra.mxu0 0.0
        %621 = vmatpush.msra.mxu0 0.0
        %622 = vmatpush.msra.mxu0 0.0
        %623 = vmatpush.msra.mxu0 0.0
        %624 = vmatpush.msra.mxu0 0.0
        %625 = vmatpush.msra.mxu0 0.0
        %626 = vmatpush.msra.mxu0 0.0
        %627 = vmatpush.msra.mxu0 0.0
        %628 = vmatpush.msra.mxu0 %v286
        %629 = vmatpush.msra.mxu0 %v285
        %630 = vmatpush.msra.mxu0 %v284
        %631 = vmatpush.msra.mxu0 %v283
        %632 = vmatmul.f32.gmra.mxu0 %v605
        %v633 = vpop.f32.mrf.mxu0
        %v634 = vadd.f32 %v593, %v633
        %635 = vmatmul.f32.gmra.mxu0 %v608
        %v636 = vpop.f32.mrf.mxu0
        %v637 = vadd.f32 %v596, %v636
        %638 = vmatmul.f32.gmra.mxu0 %v611
        %v639 = vpop.f32.mrf.mxu0
        %v640 = vadd.f32 %v599, %v639
        %641 = vmatmul.f32.gmra.mxu0 %v614
        %v642 = vpop.f32.mrf.mxu0
        %v643 = vadd.f32 %v602, %v642
        %644 = vdwg.mxu0
        %645 = vset.pattern.permute.xlu0 3
        %646 = vperm.xlu0 %645, %v368
        %v647 = vpop.permute.xlu0 %646
        %649 = vset.pattern.permute.xlu0 3
        %650 = vperm.xlu0 %649, %v369
        %v651 = vpop.permute.xlu0 %650
        %653 = vset.pattern.permute.xlu0 3
        %654 = vperm.xlu0 %653, %v370
        %v655 = vpop.permute.xlu0 %654
        %657 = vset.pattern.permute.xlu0 3
        %658 = vperm.xlu0 %657, %v371
        %v659 = vpop.permute.xlu0 %658
        %v661 = vadd.f32 %v634, %v647
        %v662 = vadd.f32 %v637, %v651
        %v663 = vadd.f32 %v640, %v655
        %v664 = vadd.f32 %v643, %v659
        %v665 = vmul.f32 %v661, %v392
        %v666 = vmul.f32 %v662, %v393
        %v667 = vmul.f32 %v663, %v394
        %v668 = vmul.f32 %v664, %v395
        %v669 = vmax.f32 %v665, 0.0
        %v670 = vmax.f32 %v666, 0.0
        %v671 = vmax.f32 %v667, 0.0
        %v672 = vmax.f32 %v668, 0.0
        %v673 = vld [vmem:[%s3 + $0x80] sm:$0xff]
        %v674 = vld [vmem:[%s3 + $0x88] sm:$0xff]
        %v675 = vld [vmem:[%s3 + $0x90] sm:$0xff]
        %v676 = vld [vmem:[%s3 + $0x98] sm:$0xff]
        %677 = vset.pattern.permute.xlu0 4
        %678 = vperm.xlu0 %677, %v368
        %v679 = vpop.permute.xlu0 %678
        %681 = vset.pattern.permute.xlu0 4
        %682 = vperm.xlu0 %681, %v369
        %v683 = vpop.permute.xlu0 %682
        %685 = vset.pattern.permute.xlu0 4
        %686 = vperm.xlu0 %685, %v370
        %v687 = vpop.permute.xlu0 %686
        %689 = vset.pattern.permute.xlu0 4
        %690 = vperm.xlu0 %689, %v371
        %v691 = vpop.permute.xlu0 %690
        %v694 = vsel %vm436, %v673, 0
        %v697 = vsel %vm436, %v674, 0
        %v700 = vsel %vm436, %v675, 0
        %v703 = vsel %vm436, %v676, 0
        %705 = vmatpush.msra.mxu0 0.0
        %706 = vmatpush.msra.mxu0 0.0
        %707 = vmatpush.msra.mxu0 0.0
        %708 = vmatpush.msra.mxu0 0.0
        %709 = vmatpush.msra.mxu0 0.0
        %710 = vmatpush.msra.mxu0 0.0
        %711 = vmatpush.msra.mxu0 0.0
        %712 = vmatpush.msra.mxu0 0.0
        %713 = vmatpush.msra.mxu0 0.0
        %714 = vmatpush.msra.mxu0 0.0
        %715 = vmatpush.msra.mxu0 0.0
        %716 = vmatpush.msra.mxu0 0.0
        %717 = vmatpush.msra.mxu0 %v672
        %718 = vmatpush.msra.mxu0 %v671
        %719 = vmatpush.msra.mxu0 %v670
        %720 = vmatpush.msra.mxu0 %v669
        %721 = vmatmul.f32.gmra.mxu0 %v694
        %v722 = vpop.f32.mrf.mxu0
        %v723 = vadd.f32 %v679, %v722
        %724 = vmatmul.f32.gmra.mxu0 %v697
        %v725 = vpop.f32.mrf.mxu0
        %v726 = vadd.f32 %v683, %v725
        %727 = vmatmul.f32.gmra.mxu0 %v700
        %v728 = vpop.f32.mrf.mxu0
        %v729 = vadd.f32 %v687, %v728
        %730 = vmatmul.f32.gmra.mxu0 %v703
        %v731 = vpop.f32.mrf.mxu0
        %v732 = vadd.f32 %v691, %v731
        %733 = vdwg.mxu0
        %v734 = vmul.f32 %v723, %v392
        %v735 = vmul.f32 %v726, %v393
        %v736 = vmul.f32 %v729, %v394
        %v737 = vmul.f32 %v732, %v395
        %v738 = vmax.f32 %v734, 0.0
        %v739 = vmax.f32 %v735, 0.0
        %v740 = vmax.f32 %v736, 0.0
        %v741 = vmax.f32 %v737, 0.0
        %v742 = vld [vmem:[%s3 + $0xa0] sm:$0xff]
        %v743 = vld [vmem:[%s3 + $0xa8] sm:$0xff]
        %v744 = vld [vmem:[%s3 + $0xb0] sm:$0xff]
        %v745 = vld [vmem:[%s3 + $0xb8] sm:$0xff]
        %v746 = vld [vmem:[%s3 + $0xc0] sm:$0xff]
        %v747 = vld [vmem:[%s3 + $0xc8] sm:$0xff]
        %v748 = vld [vmem:[%s3 + $0xd0] sm:$0xff]
        %v749 = vld [vmem:[%s3 + $0xd8] sm:$0xff]
        %v751 = vsel %vm436, %v742, 0
        %v754 = vsel %vm436, %v743, 0
        %v757 = vsel %vm436, %v744, 0
        %v760 = vsel %vm436, %v745, 0
        %v763 = vsel %vm436, %v746, 0
        %v766 = vsel %vm436, %v747, 0
        %v769 = vsel %vm436, %v748, 0
        %v772 = vsel %vm436, %v749, 0
        %774 = vmatpush.msra.mxu0 0.0
        %775 = vmatpush.msra.mxu0 0.0
        %776 = vmatpush.msra.mxu0 0.0
        %777 = vmatpush.msra.mxu0 0.0
        %778 = vmatpush.msra.mxu0 0.0
        %779 = vmatpush.msra.mxu0 0.0
        %780 = vmatpush.msra.mxu0 0.0
        %781 = vmatpush.msra.mxu0 0.0
        %782 = vmatpush.msra.mxu0 0.0
        %783 = vmatpush.msra.mxu0 0.0
        %784 = vmatpush.msra.mxu0 0.0
        %785 = vmatpush.msra.mxu0 0.0
        %786 = vmatpush.msra.mxu0 %v741
        %787 = vmatpush.msra.mxu0 %v740
        %788 = vmatpush.msra.mxu0 %v739
        %789 = vmatpush.msra.mxu0 %v738
        %790 = vmatmul.f32.gmra.mxu0 %v751
        %v791 = vpop.f32.mrf.mxu0
        %v792 = vadd.f32 0.0, %v791
        %793 = vmatmul.f32.gmra.mxu0 %v754
        %v794 = vpop.f32.mrf.mxu0
        %v795 = vadd.f32 0.0, %v794
        %796 = vmatmul.f32.gmra.mxu0 %v757
        %v797 = vpop.f32.mrf.mxu0
        %v798 = vadd.f32 0.0, %v797
        %799 = vmatmul.f32.gmra.mxu0 %v760
        %v800 = vpop.f32.mrf.mxu0
        %v801 = vadd.f32 0.0, %v800
        %802 = vmatmul.f32.gmra.mxu0 %v763
        %v803 = vpop.f32.mrf.mxu0
        %v804 = vadd.f32 0.0, %v803
        %805 = vmatmul.f32.gmra.mxu0 %v766
        %v806 = vpop.f32.mrf.mxu0
        %v807 = vadd.f32 0.0, %v806
        %808 = vmatmul.f32.gmra.mxu0 %v769
        %v809 = vpop.f32.mrf.mxu0
        %v810 = vadd.f32 0.0, %v809
        %811 = vmatmul.f32.gmra.mxu0 %v772
        %v812 = vpop.f32.mrf.mxu0
        %v813 = vadd.f32 0.0, %v812
        %814 = vdwg.mxu0
        %v815 = vrot.slane %v792, 4
        %v816 = vmax.f32 %v792, %v815
        %v817 = vrot.slane %v816, 2
        %v818 = vmax.f32 %v816, %v817
        %v819 = vrot.slane %v818, 1
        %v820 = vmax.f32 %v818, %v819
        %v821 = vrot.slane %v795, 4
        %v822 = vmax.f32 %v795, %v821
        %v823 = vrot.slane %v822, 2
        %v824 = vmax.f32 %v822, %v823
        %v825 = vrot.slane %v824, 1
        %v826 = vmax.f32 %v824, %v825
        %v827 = vrot.slane %v798, 4
        %v828 = vmax.f32 %v798, %v827
        %v829 = vrot.slane %v828, 2
        %v830 = vmax.f32 %v828, %v829
        %v831 = vrot.slane %v830, 1
        %v832 = vmax.f32 %v830, %v831
        %v833 = vrot.slane %v801, 4
        %v834 = vmax.f32 %v801, %v833
        %v835 = vrot.slane %v834, 2
        %v836 = vmax.f32 %v834, %v835
        %v837 = vrot.slane %v836, 1
        %v838 = vmax.f32 %v836, %v837
        %v839 = vsub.f32 %v792, %v820
        %v840 = vsub.f32 %v795, %v826
        %v841 = vsub.f32 %v798, %v832
        %v842 = vsub.f32 %v801, %v838
        %v843 = vmul.f32 %v839, 1.442695
        %v844 = vpow.pop %v843
        %v845 = vmul.f32 %v840, 1.442695
        %v846 = vpow.pop %v845
        %v847 = vmul.f32 %v841, 1.442695
        %v848 = vpow.pop %v847
        %v849 = vmul.f32 %v842, 1.442695
        %v850 = vpow.pop %v849
        %v851 = vrot.slane %v844, 4
        %v852 = vadd.f32 %v844, %v851
        %v853 = vrot.slane %v852, 2
        %v854 = vadd.f32 %v852, %v853
        %v855 = vrot.slane %v854, 1
        %v856 = vadd.f32 %v854, %v855
        %v857 = vrot.slane %v846, 4
        %v858 = vadd.f32 %v846, %v857
        %v859 = vrot.slane %v858, 2
        %v860 = vadd.f32 %v858, %v859
        %v861 = vrot.slane %v860, 1
        %v862 = vadd.f32 %v860, %v861
        %v863 = vrot.slane %v848, 4
        %v864 = vadd.f32 %v848, %v863
        %v865 = vrot.slane %v864, 2
        %v866 = vadd.f32 %v864, %v865
        %v867 = vrot.slane %v866, 1
        %v868 = vadd.f32 %v866, %v867
        %v869 = vrot.slane %v850, 4
        %v870 = vadd.f32 %v850, %v869
        %v871 = vrot.slane %v870, 2
        %v872 = vadd.f32 %v870, %v871
        %v873 = vrot.slane %v872, 1
        %v874 = vadd.f32 %v872, %v873
        %v875 = vrcp.pop %v856
        %v876 = vrcp.pop %v862
        %v877 = vrcp.pop %v868
        %v878 = vrcp.pop %v874
        %v879 = vmul.f32 %v856, %v875
        %v880 = vmul.f32 %v862, %v876
        %v881 = vmul.f32 %v868, %v877
        %v882 = vmul.f32 %v874, %v878
        %v883 = vsub.f32 2.0, %v879
        %v884 = vsub.f32 2.0, %v880
        %v885 = vsub.f32 2.0, %v881
        %v886 = vsub.f32 2.0, %v882
        %v887 = vmul.f32 %v875, %v883
        %v888 = vmul.f32 %v876, %v884
        %v889 = vmul.f32 %v877, %v885
        %v890 = vmul.f32 %v878, %v886
        %v891 = vmul.f32 %v844, %v887
        %v892 = vmul.f32 %v846, %v888
        %v893 = vmul.f32 %v848, %v889
        %v894 = vmul.f32 %v850, %v890
        %vm895 = vcmp.gt.f32.partialorder %v293, 0.0
        %v896 = vsel %vm895, 1, 0
        %v897 = vperm.slane %v896, 0
        %vm898 = vcmp.eq.s32.totalorder %v897, 1
        %v899 = vsel %vm898, %v412, -1e+09
        %v900 = vsel %vm898, %v413, -1e+09
        %v901 = vsel %vm898, %v414, -1e+09
        %v902 = vsel %vm898, %v415, -1e+09
        %903 = vmax.xlane.f32.xlu0 %v899
        %v904 = vpop.xlane.xlu0 %903
        %905 = vmax.xlane.f32.xlu0 %v900
        %v906 = vpop.xlane.xlu0 %905
        %907 = vmax.xlane.f32.xlu0 %v901
        %v908 = vpop.xlane.xlu0 %907
        %909 = vmax.xlane.f32.xlu0 %v902
        %v910 = vpop.xlane.xlu0 %909
        %v911 = vsub.f32 %v899, %v904
        %v912 = vsub.f32 %v900, %v906
        %v913 = vsub.f32 %v901, %v908
        %v914 = vsub.f32 %v902, %v910
        %v915 = vmul.f32 %v911, 1.442695
        %v916 = vpow.pop %v915
        %v917 = vmul.f32 %v912, 1.442695
        %v918 = vpow.pop %v917
        %v919 = vmul.f32 %v913, 1.442695
        %v920 = vpow.pop %v919
        %v921 = vmul.f32 %v914, 1.442695
        %v922 = vpow.pop %v921
        %923 = vadd.xlane.f32.xlu0 %v916
        %v924 = vpop.xlane.xlu0 %923
        %925 = vadd.xlane.f32.xlu0 %v918
        %v926 = vpop.xlane.xlu0 %925
        %927 = vadd.xlane.f32.xlu0 %v920
        %v928 = vpop.xlane.xlu0 %927
        %929 = vadd.xlane.f32.xlu0 %v922
        %v930 = vpop.xlane.xlu0 %929
        %v931 = vrcp.pop %v924
        %v932 = vrcp.pop %v926
        %v933 = vrcp.pop %v928
        %v934 = vrcp.pop %v930
        %v935 = vmul.f32 %v924, %v931
        %v936 = vmul.f32 %v926, %v932
        %v937 = vmul.f32 %v928, %v933
        %v938 = vmul.f32 %v930, %v934
        %v939 = vsub.f32 2.0, %v935
        %v940 = vsub.f32 2.0, %v936
        %v941 = vsub.f32 2.0, %v937
        %v942 = vsub.f32 2.0, %v938
        %v943 = vmul.f32 %v931, %v939
        %v944 = vmul.f32 %v932, %v940
        %v945 = vmul.f32 %v933, %v941
        %v946 = vmul.f32 %v934, %v942
        %v947 = vmul.f32 %v916, %v943
        %v948 = vmul.f32 %v918, %v944
        %v949 = vmul.f32 %v920, %v945
        %v950 = vmul.f32 %v922, %v946
        %951 = vmatpush.xpose.msra.mxu0 0.0
        %952 = vmatpush.xpose.msra.mxu0 0.0
        %953 = vmatpush.xpose.msra.mxu0 0.0
        %954 = vmatpush.xpose.msra.mxu0 0.0
        %955 = vmatpush.xpose.msra.mxu0 0.0
        %956 = vmatpush.xpose.msra.mxu0 0.0
        %957 = vmatpush.xpose.msra.mxu0 0.0
        %958 = vmatpush.xpose.msra.mxu0 0.0
        %959 = vmatpush.xpose.msra.mxu0 0.0
        %960 = vmatpush.xpose.msra.mxu0 0.0
        %961 = vmatpush.xpose.msra.mxu0 0.0
        %962 = vmatpush.xpose.msra.mxu0 0.0
        %963 = vmatpush.xpose.msra.mxu0 %v950
        %964 = vmatpush.xpose.msra.mxu0 %v949
        %965 = vmatpush.xpose.msra.mxu0 %v948
        %966 = vmatpush.xpose.msra.mxu0 %v947
        %967 = vmatmul.f32.gmra.mxu0 %v804
        %v968 = vpop.f32.mrf.mxu0
        %v969 = vadd.f32 0.0, %v968
        %970 = vmatmul.f32.gmra.mxu0 %v807
        %v971 = vpop.f32.mrf.mxu0
        %v972 = vadd.f32 0.0, %v971
        %973 = vmatmul.f32.gmra.mxu0 %v810
        %v974 = vpop.f32.mrf.mxu0
        %v975 = vadd.f32 0.0, %v974
        %976 = vmatmul.f32.gmra.mxu0 %v813
        %v977 = vpop.f32.mrf.mxu0
        %v978 = vadd.f32 0.0, %v977
        %979 = vdwg.mxu0
        %v980 = vld [vmem:[%s3 + $0x100] sm:$0xff]
        %v981 = vld [vmem:[%s3 + $0x108] sm:$0xff]
        %v982 = vld [vmem:[%s3 + $0x110] sm:$0xff]
        %v983 = vld [vmem:[%s3 + $0x118] sm:$0xff]
        %v984 = vmul.f32 %v969, %v980
        %v985 = vmul.f32 %v972, %v981
        %v986 = vmul.f32 %v975, %v982
        %v987 = vmul.f32 %v978, %v983
        %v989 = vsel %vm436, %v984, 0
        %v992 = vsel %vm436, %v985, 0
        %v995 = vsel %vm436, %v986, 0
        %v998 = vsel %vm436, %v987, 0
        %1000 = vmatpush.msra.mxu0 0.0
        %1001 = vmatpush.msra.mxu0 0.0
        %1002 = vmatpush.msra.mxu0 0.0
        %1003 = vmatpush.msra.mxu0 0.0
        %1004 = vmatpush.msra.mxu0 0.0
        %1005 = vmatpush.msra.mxu0 0.0
        %1006 = vmatpush.msra.mxu0 0.0
        %1007 = vmatpush.msra.mxu0 0.0
        %1008 = vmatpush.msra.mxu0 0.0
        %1009 = vmatpush.msra.mxu0 0.0
        %1010 = vmatpush.msra.mxu0 0.0
        %1011 = vmatpush.msra.mxu0 0.0
        %1012 = vmatpush.msra.mxu0 %v894
        %1013 = vmatpush.msra.mxu0 %v893
        %1014 = vmatpush.msra.mxu0 %v892
        %1015 = vmatpush.msra.mxu0 %v891
        %1016 = vmatmul.f32.gmra.mxu0 %v989
        %v1017 = vpop.f32.mrf.mxu0
        %v1018 = vadd.f32 0.0, %v1017
        %1019 = vmatmul.f32.gmra.mxu0 %v992
        %v1020 = vpop.f32.mrf.mxu0
        %v1021 = vadd.f32 0.0, %v1020
        %1022 = vmatmul.f32.gmra.mxu0 %v995
        %v1023 = vpop.f32.mrf.mxu0
        %v1024 = vadd.f32 0.0, %v1023
        %1025 = vmatmul.f32.gmra.mxu0 %v998
        %v1026 = vpop.f32.mrf.mxu0
        %v1027 = vadd.f32 0.0, %v1026
        %1028 = vdwg.mxu0
        %v1029 = vld [vmem:[%s3 + $0xe0] sm:$0xff]
        %v1030 = vld [vmem:[%s3 + $0xe8] sm:$0xff]
        %v1031 = vld [vmem:[%s3 + $0xf0] sm:$0xff]
        %v1032 = vld [vmem:[%s3 + $0xf8] sm:$0xff]
        %v1034 = vsel %vm436, %v1029, 0
        %v1037 = vsel %vm436, %v1030, 0
        %v1040 = vsel %vm436, %v1031, 0
        %v1043 = vsel %vm436, %v1032, 0
        %1045 = vmatpush.msra.mxu0 0.0
        %1046 = vmatpush.msra.mxu0 0.0
        %1047 = vmatpush.msra.mxu0 0.0
        %1048 = vmatpush.msra.mxu0 0.0
        %1049 = vmatpush.msra.mxu0 0.0
        %1050 = vmatpush.msra.mxu0 0.0
        %1051 = vmatpush.msra.mxu0 0.0
        %1052 = vmatpush.msra.mxu0 0.0
        %1053 = vmatpush.msra.mxu0 0.0
        %1054 = vmatpush.msra.mxu0 0.0
        %1055 = vmatpush.msra.mxu0 0.0
        %1056 = vmatpush.msra.mxu0 0.0
        %1057 = vmatpush.msra.mxu0 %v1027
        %1058 = vmatpush.msra.mxu0 %v1024
        %1059 = vmatpush.msra.mxu0 %v1021
        %1060 = vmatpush.msra.mxu0 %v1018
        %1061 = vmatmul.f32.gmra.mxu0 %v1034
        %v1062 = vpop.f32.mrf.mxu0
        %v1063 = vadd.f32 %v738, %v1062
        %1064 = vmatmul.f32.gmra.mxu0 %v1037
        %v1065 = vpop.f32.mrf.mxu0
        %v1066 = vadd.f32 %v739, %v1065
        %1067 = vmatmul.f32.gmra.mxu0 %v1040
        %v1068 = vpop.f32.mrf.mxu0
        %v1069 = vadd.f32 %v740, %v1068
        %1070 = vmatmul.f32.gmra.mxu0 %v1043
        %v1071 = vpop.f32.mrf.mxu0
        %v1072 = vadd.f32 %v741, %v1071
        %1073 = vdwg.mxu0
        %v1074 = vadd.f32 %v1063, %v1066
        %v1075 = vadd.f32 %v1074, %v1069
        %v1076 = vadd.f32 %v1075, %v1072
        %v1077 = vrot.slane %v1076, 4
        %v1078 = vadd.f32 %v1076, %v1077
        %v1079 = vrot.slane %v1078, 2
        %v1080 = vadd.f32 %v1078, %v1079
        %v1081 = vrot.slane %v1080, 1
        %v1082 = vadd.f32 %v1080, %v1081
        %v1083 = vrcp.pop 32.0
        %v1084 = vmul.f32 32.0, %v1083
        %v1085 = vsub.f32 1.0, %v1084
        %v1086 = vmul.f32 %v1083, %v1085
        %v1087 = vadd.f32 %v1083, %v1086
        %vm1088 = vweird.f32 %v1083
        %v1089 = vsel %vm1088, %v1083, %v1087
        %v1090 = vmul.f32 %v1082, %v1089
        %v1091 = vsub.f32 %v1063, %v1090
        %v1092 = vsub.f32 %v1066, %v1090
        %v1093 = vsub.f32 %v1069, %v1090
        %v1094 = vsub.f32 %v1072, %v1090
        %v1095 = vmul.f32 %v1091, %v1091
        %v1096 = vmul.f32 %v1092, %v1092
        %v1097 = vmul.f32 %v1093, %v1093
        %v1098 = vmul.f32 %v1094, %v1094
        %v1099 = vadd.f32 %v1095, %v1096
        %v1100 = vadd.f32 %v1099, %v1097
        %v1101 = vadd.f32 %v1100, %v1098
        %v1102 = vrot.slane %v1101, 4
        %v1103 = vadd.f32 %v1101, %v1102
        %v1104 = vrot.slane %v1103, 2
        %v1105 = vadd.f32 %v1103, %v1104
        %v1106 = vrot.slane %v1105, 1
        %v1107 = vadd.f32 %v1105, %v1106
        %v1108 = vmul.f32 %v1107, %v1089
        %v1109 = vadd.f32 %v1108, 1e-05
        %v1110 = vrsqrt.pop %v1109
        %v1111 = vmul.f32 %v1110, %v1109
        %v1112 = vmul.f32 %v1111, %v1110
        %v1113 = vmul.f32 0.5, %v1112
        %v1114 = vsub.f32 1.5, %v1113
        %v1115 = vmul.f32 %v1110, %v1114
        %vm1116 = vweird.f32 %v1109
        %vm1117 = vweird.f32 %v1110
        %vm1118 = vmor %vm1116, %vm1117
        %v1119 = vsel %vm1118, %v1110, %v1115
        %v1120 = vmul.f32 %v1091, %v1119
        %v1121 = vmul.f32 %v1092, %v1119
        %v1122 = vmul.f32 %v1093, %v1119
        %v1123 = vmul.f32 %v1094, %v1119
        %1124 = vset.pattern.permute.xlu0 6
        %1125 = vperm.xlu0 %1124, %v368
        %v1126 = vpop.permute.xlu0 %1125
        %1128 = vset.pattern.permute.xlu0 6
        %1129 = vperm.xlu0 %1128, %v369
        %v1130 = vpop.permute.xlu0 %1129
        %1132 = vset.pattern.permute.xlu0 6
        %1133 = vperm.xlu0 %1132, %v370
        %v1134 = vpop.permute.xlu0 %1133
        %1136 = vset.pattern.permute.xlu0 6
        %1137 = vperm.xlu0 %1136, %v371
        %v1138 = vpop.permute.xlu0 %1137
        %v1140 = vmul.f32 %v1120, %v1126
        %v1141 = vmul.f32 %v1121, %v1130
        %v1142 = vmul.f32 %v1122, %v1134
        %v1143 = vmul.f32 %v1123, %v1138
        %1144 = vset.pattern.permute.xlu0 7
        %1145 = vperm.xlu0 %1144, %v368
        %v1146 = vpop.permute.xlu0 %1145
        %1148 = vset.pattern.permute.xlu0 7
        %1149 = vperm.xlu0 %1148, %v369
        %v1150 = vpop.permute.xlu0 %1149
        %1152 = vset.pattern.permute.xlu0 7
        %1153 = vperm.xlu0 %1152, %v370
        %v1154 = vpop.permute.xlu0 %1153
        %1156 = vset.pattern.permute.xlu0 7
        %1157 = vperm.xlu0 %1156, %v371
        %v1158 = vpop.permute.xlu0 %1157
        %v1160 = vadd.f32 %v1140, %v1146
        %v1161 = vadd.f32 %v1141, %v1150
        %v1162 = vadd.f32 %v1142, %v1154
        %v1163 = vadd.f32 %v1143, %v1158
        %v1164 = vld [vmem:[%s3 + $0x120] sm:$0xff]
        %v1166 = vsel %vm436, %v1164, 0
        %1168 = vmatpush.msra.mxu0 0.0
        %1169 = vmatpush.msra.mxu0 0.0
        %1170 = vmatpush.msra.mxu0 0.0
        %1171 = vmatpush.msra.mxu0 0.0
        %1172 = vmatpush.msra.mxu0 0.0
        %1173 = vmatpush.msra.mxu0 0.0
        %1174 = vmatpush.msra.mxu0 0.0
        %1175 = vmatpush.msra.mxu0 0.0
        %1176 = vmatpush.msra.mxu0 0.0
        %1177 = vmatpush.msra.mxu0 0.0
        %1178 = vmatpush.msra.mxu0 0.0
        %1179 = vmatpush.msra.mxu0 0.0
        %1180 = vmatpush.msra.mxu0 %v1163
        %1181 = vmatpush.msra.mxu0 %v1162
        %1182 = vmatpush.msra.mxu0 %v1161
        %1183 = vmatpush.msra.mxu0 %v1160
        %1184 = vmatmul.f32.gmra.mxu0 %v1166
        %v1185 = vpop.f32.mrf.mxu0
        %v1186 = vadd.f32 0.0, %v1185
        %1187 = vdwg.mxu0
        %v1188 = vld [vmem:[%s5] sm:$0x1]
        %1190 = vset.pattern.permute.xlu0 8
        %1191 = vperm.xlu0 %1190, %v1188
        %v1192 = vpop.permute.xlu0 %1191
        %v1194 = vadd.f32 %v1186, %v1192
        %1195 = vst [vmem:[%s269] sm:$0x1] %v1194
        %s1196 = sand.u32 %s169, 1
        %s1197 = scalar_lea.sflag [#allocation3], %s1196
        %s1198 = sand.u32 %s169, 1
        %s1199 = scalar_lea.vmem [#allocation2], %s1198
        // Predicated region
        $region45: #{vl_mod_attention.1} parent=43 // pred_check
          %p1200 = pneg %p179
        $region46: #{vl_mod_attention.1} parent=43 // pred_check_branch
          %1202 = sbr.rel (%p1200) target = $region48
        $region47: #{vl_mod_attention.1} parent=43 // pred_region
          %1204 = vsyncadd %s1197, 0
          %s1205 = scalar_lea.hbm %s6, %s20
          %s1207 = sshll.u32 %s1199, 4
          %s1208 = int_to_ptr.vmem [resolvable:$true] %s1207
          %s1209 = sshll.u32 %s1205, 4
          %s1210 = int_to_ptr.hbm [resolvable:$true] %s1209
          %1212 = dma.vmem_to_hbm [thread:$0]  %s1208, 16, %s1210, %s1197
        $region48: #{vl_mod_attention.1} parent=43 // pred_fallthru
          _
      $region44: #{vl_mod_attention.1} parent=5 // pred_fallthru
        _
      %p1213 = scmp.le.s32.totalorder 2, %s15
      // Predicated region
      $region49: #{vl_mod_attention.1} parent=5 // pred_check
        %p1214 = pneg %p1213
      $region50: #{vl_mod_attention.1} parent=5 // pred_check_branch
        %1216 = sbr.rel (%p1214) target = $region52
      $region51: #{vl_mod_attention.1} parent=5 // pred_region
        %s1217 = ssub.s32 %s15, 2
        // Predicated region
        $region53: #{vl_mod_attention.1} parent=51 // pred_check
          %p1218 = pneg %p185
        $region54: #{vl_mod_attention.1} parent=51 // pred_check_branch
          %1220 = sbr.rel (%p1218) target = $region56
        $region55: #{vl_mod_attention.1} parent=51 // pred_region
          %s1221 = sand.u32 %s170, 1
          %s1222 = scalar_lea.sflag [#allocation3], %s1221
          %s1223 = sand.u32 %s170, 1
          %s1224 = scalar_lea.vmem [#allocation2], %s1223
          %1226 = dma.done %s1222, 16
        $region56: #{vl_mod_attention.1} parent=51 // pred_fallthru
          _
      $region52: #{vl_mod_attention.1} parent=5 // pred_fallthru
        _
    $region6: #{vl_mod_attention.1} parent=1 // loop_footer
      %s19 = sadd.s32 1, %s15
    $region7: #{vl_mod_attention.1} parent=1 // loop_footer_branch
      %14 = sbr.rel target = $region3
    $region8: #{vl_mod_attention.1} parent=1 // loop_exit
      _
    %1227 = vsyncpa [#allocation3], 1
    %s1228 = scalar_lea.sflag [#allocation3], 1
    %1229 = vsyncpa %s1228, 1

</llo_original>
